<compile_context>
chip_gen: v5e
topology: v5e:2x2
jax: 0.10.0
libtpu: 0.0.40
codegen_flags: <defaults>
</compile_context>

<pallas_src>
import functools

import jax
import jax.numpy as jnp
from jax import lax
from jax.experimental import pallas as pl
from jax.experimental.pallas import tpu as pltpu


def _weakly_kernel(logits_i_ref, labels_i_ref, feat_a_ref,
                   logits_j_ref, labels_j_ref, feat_b_ref,
                   ce_ref, cnt_ref, crf_ref,
                   s_i_ref,
                   *, ignore_index):
    i = pl.program_id(1)
    j = pl.program_id(2)

    @pl.when((i == 0) & (j == 0))
    def _init():
        ce_ref[...] = jnp.zeros_like(ce_ref)
        cnt_ref[...] = jnp.zeros_like(cnt_ref)
        crf_ref[...] = jnp.zeros_like(crf_ref)

    # ---------------- i-tile work: CE + resident s_i (once per (b, i)) ------
    @pl.when(j == 0)
    def _i_tile():
        logits_i = logits_i_ref[0]                       # (C, TI) f32
        labels_i = labels_i_ref[0]                       # (1, TI) i32

        m = jnp.max(logits_i, axis=0, keepdims=True)     # (1, TI)
        e = jnp.exp(logits_i - m)                        # (C, TI)
        denom = jnp.sum(e, axis=0, keepdims=True)        # (1, TI)

        # cross entropy with ignore_index (sum + valid count, per batch elem)
        lse = m + jnp.log(denom)                         # (1, TI)
        cls = lax.broadcasted_iota(jnp.int32, logits_i.shape, 0)
        picked = jnp.sum(jnp.where(cls == labels_i, logits_i, 0.0),
                         axis=0, keepdims=True)          # (1, TI)
        valid = (labels_i != ignore_index).astype(jnp.float32)
        ce = (lse - picked) * valid
        ce_ref[...] = ce_ref[...] + jnp.sum(ce)
        cnt_ref[...] = cnt_ref[...] + jnp.sum(valid)

        # resident i-tile of s = softmax(logits) * (labels != 254)
        crop = (labels_i != 254).astype(jnp.float32)
        s_i_ref[...] = e * pl.reciprocal(denom, approx=True) * crop

    # ---------------- CRF block: resident i-tile x streamed j-tile ----------
    logits_j = logits_j_ref[0]                           # (C, TJ)
    labels_j = labels_j_ref[0]                           # (1, TJ)

    mj = jnp.max(logits_j, axis=0, keepdims=True)
    ej = jnp.exp(logits_j - mj)
    invj = pl.reciprocal(jnp.sum(ej, axis=0, keepdims=True), approx=True)
    s_j = ej * invj * (labels_j != 254).astype(jnp.float32)   # (C, TJ)

    # -0.5 * pairwise squared distance from one 8-row MXU matmul of the
    # augmented features (no (HW,HW) eye / explicit row+col broadcast needed).
    neg_half_dist = lax.dot_general(
        feat_a_ref[0], feat_b_ref[0], (((0,), (0,)), ((), ())),
        preferred_element_type=jnp.float32)                   # (TI, TJ)
    kmat = jnp.exp(neg_half_dist)                             # (TI, TJ)

    # Gs[p, q] = sum_c s_i[c, p] * s_j[c, q]  (lane-dense MXU output)
    gs = lax.dot_general(
        s_i_ref[...], s_j, (((0,), (0,)), ((), ())),
        preferred_element_type=jnp.float32)                   # (TI, TJ)

    crf_ref[...] = crf_ref[...] + jnp.sum(kmat * gs)


def _pick_tile(hw, max_tile=512):
    for t in range(min(hw, max_tile), 0, -128):
        if t % 128 == 0 and hw % t == 0:
            return t
    return hw   # fall back to a single full-extent block


def weakly_loss(y_pred, y_true, x, *, dense_crf_weight, loss_fn="ce",
                ignore_index=255, sigma_rgb=15.0, sigma_xy=80.0):
    assert loss_fn == "ce", "only the 'ce' path is implemented"
    B, C, H, W = y_pred.shape
    HW = H * W
    TI = _pick_tile(HW)
    TJ = TI
    NI = HW // TI
    NJ = HW // TJ

    logits = y_pred.reshape(B, C, HW).astype(jnp.float32)
    labels = y_true.reshape(B, 1, HW).astype(jnp.int32)
    img = x.reshape(B, 3, HW).astype(jnp.float32)

    # Batch-invariant / O(HW) feature construction hoisted out of the kernel
    # (also avoids captured jnp.array constants inside the kernel body).
    mean = jnp.array([0.485, 0.456, 0.406], jnp.float32).reshape(1, 3, 1)
    std = jnp.array([0.229, 0.224, 0.225], jnp.float32).reshape(1, 3, 1)
    rgb = (img * std + mean) * (255.0 / sigma_rgb)            # (B, 3, HW)

    pix = jnp.arange(HW, dtype=jnp.int32)
    xx = (pix % W).astype(jnp.float32) / sigma_xy
    yy = (pix // W).astype(jnp.float32) / sigma_xy
    coords = jnp.broadcast_to(jnp.stack([xx, yy], axis=0)[None], (B, 2, HW))

    feat = jnp.concatenate([rgb, coords], axis=1)             # (B, 5, HW)
    sq = jnp.sum(feat * feat, axis=1, keepdims=True)          # (B, 1, HW)
    ones = jnp.ones((B, 1, HW), jnp.float32)
    zeros = jnp.zeros((B, 1, HW), jnp.float32)
    # A_i^T B_j = f_p.f_q - 0.5*(|f_p|^2 + |f_q|^2) = -0.5 * dist(p, q)
    feat_a = jnp.concatenate([feat, ones, sq, zeros], axis=1)             # (B, 8, HW)
    feat_b = jnp.concatenate([feat, -0.5 * sq, -0.5 * ones, zeros], axis=1)  # (B, 8, HW)

    kernel = functools.partial(_weakly_kernel, ignore_index=ignore_index)

    in_bytes = 4 * HW * (C + 1 + 8)
    cost = pl.CostEstimate(
        flops=int(2 * B * HW * HW * (8 + C)),
        transcendentals=int(B * HW * HW),
        bytes_accessed=int(B * in_bytes * (1 + NI) + 3 * B * 128 * 4),
    )

    ce_sum, cnt, crf = pl.pallas_call(
        kernel,
        out_shape=(jax.ShapeDtypeStruct((B, 1, 128), jnp.float32),
                   jax.ShapeDtypeStruct((B, 1, 128), jnp.float32),
                   jax.ShapeDtypeStruct((B, 1, 128), jnp.float32)),
        grid_spec=pltpu.PrefetchScalarGridSpec(
            num_scalar_prefetch=0,
            grid=(B, NI, NJ),
            in_specs=[
                # i-tile operands (block index constant over j -> no re-DMA)
                pl.BlockSpec((1, C, TI), lambda b, i, j: (b, 0, i)),
                pl.BlockSpec((1, 1, TI), lambda b, i, j: (b, 0, i)),
                pl.BlockSpec((1, 8, TI), lambda b, i, j: (b, 0, i)),
                # j-tile operands (streamed / double-buffered)
                pl.BlockSpec((1, C, TJ), lambda b, i, j: (b, 0, j)),
                pl.BlockSpec((1, 1, TJ), lambda b, i, j: (b, 0, j)),
                pl.BlockSpec((1, 8, TJ), lambda b, i, j: (b, 0, j)),
            ],
            out_specs=[
                pl.BlockSpec((1, 1, 128), lambda b, i, j: (b, 0, 0)),
                pl.BlockSpec((1, 1, 128), lambda b, i, j: (b, 0, 0)),
                pl.BlockSpec((1, 1, 128), lambda b, i, j: (b, 0, 0)),
            ],
            scratch_shapes=[pltpu.VMEM((C, TI), jnp.float32)],
        ),
        compiler_params=pltpu.CompilerParams(
            dimension_semantics=("parallel", "arbitrary", "arbitrary"),
            vmem_limit_bytes=32 * 1024 * 1024),
        cost_estimate=cost,
    )(logits, labels, feat_a, logits, labels, feat_b)

    ce_b = ce_sum[:, 0, 0]     # (B,)
    cnt_b = cnt[:, 0, 0]       # (B,)
    crf_b = crf[:, 0, 0]       # (B,)

    # nn.CrossEntropyLoss(ignore_index) 'mean' over valid pixels, then /= n
    # (WeaklyLoss.CrossEntropyLoss has batch_average=True).
    ce_loss = (jnp.sum(ce_b) / jnp.maximum(jnp.sum(cnt_b), 1.0)) / B
    # DenseCRFLoss: weight * ( - sum_b s^T K s / B )
    regularization = dense_crf_weight * (-(jnp.sum(crf_b)) / B)
    return ce_loss + regularization


if __name__ == "__main__":
    key = jax.random.PRNGKey(0)
    k1, k2, k3, k4 = jax.random.split(key, 4)

    B, C, H, W = 2, 4, 16, 16
    y_pred = jax.random.normal(k1, (B, C, H, W), jnp.float32)
    y_true = jax.random.randint(k2, (B, H, W), 0, C).astype(jnp.int32)
    ignore_mask = jax.random.uniform(k3, (B, H, W)) < 0.1
    y_true = jnp.where(ignore_mask, 255, y_true)          # some ignored pixels
    x = jax.random.normal(k4, (B, 3, H, W), jnp.float32)  # normalized image

    loss = weakly_loss(y_pred, y_true, x, dense_crf_weight=2e-9)
    jax.block_until_ready(loss)
    print("KERNEL_OK")
</pallas_src>

<mosaic_0001>
module attributes {stable_mosaic.version = 11 : i64} {
  func.func @_weakly_kernel(%arg0: i32, %arg1: i32, %arg2: i32, %arg3: memref<1x4x256xf32, #tpu.memory_space<vmem>>, %arg4: memref<1x1x256xi32, #tpu.memory_space<vmem>>, %arg5: memref<1x8x256xf32, #tpu.memory_space<vmem>>, %arg6: memref<1x4x256xf32, #tpu.memory_space<vmem>>, %arg7: memref<1x1x256xi32, #tpu.memory_space<vmem>>, %arg8: memref<1x8x256xf32, #tpu.memory_space<vmem>>, %arg9: memref<1x1x128xf32, #tpu.memory_space<vmem>>, %arg10: memref<1x1x128xf32, #tpu.memory_space<vmem>>, %arg11: memref<1x1x128xf32, #tpu.memory_space<vmem>>, %arg12: memref<4x256xf32, #tpu.memory_space<vmem>>) attributes {dimension_semantics = [#tpu.dimension_semantics<parallel>, #tpu.dimension_semantics<arbitrary>, #tpu.dimension_semantics<arbitrary>], iteration_bounds = array<i64: 2, 1, 1>, scalar_prefetch = 0 : i64, scratch_operands = 1 : i64, tpu.core_type = #tpu.core_type<tc>, window_params = [{transform_indices = @transform_0, window_bounds = array<i64: 1, 4, 256>}, {transform_indices = @transform_1, window_bounds = array<i64: 1, 1, 256>}, {transform_indices = @transform_2, window_bounds = array<i64: 1, 8, 256>}, {transform_indices = @transform_3, window_bounds = array<i64: 1, 4, 256>}, {transform_indices = @transform_4, window_bounds = array<i64: 1, 1, 256>}, {transform_indices = @transform_5, window_bounds = array<i64: 1, 8, 256>}, {transform_indices = @transform_6, window_bounds = array<i64: 1, 1, 128>}, {transform_indices = @transform_7, window_bounds = array<i64: 1, 1, 128>}, {transform_indices = @transform_8, window_bounds = array<i64: 1, 1, 128>}]} {
    %c0_i32 = arith.constant 0 : i32
    %0 = arith.cmpi eq, %arg1, %c0_i32 : i32
    %c0_i32_0 = arith.constant 0 : i32
    %1 = arith.cmpi eq, %arg2, %c0_i32_0 : i32
    %2 = arith.andi %0, %1 : i1
    %3 = arith.extui %2 : i1 to i32
    %c0_i32_1 = arith.constant 0 : i32
    %4 = arith.cmpi ne, %3, %c0_i32_1 : i32
    scf.if %4 {
      %cst_27 = arith.constant 0.000000e+00 : f32
      %45 = vector.broadcast %cst_27 : f32 to vector<1x1x128xf32>
      %c0_28 = arith.constant 0 : index
      %c0_29 = arith.constant 0 : index
      %c0_30 = arith.constant 0 : index
      %46 = vector.load %arg9[%c0_28, %c0_29, %c0_30] : memref<1x1x128xf32, #tpu.memory_space<vmem>>, vector<1x1x128xf32>
      tpu.vector_store %arg9[%c0_28, %c0_29, %c0_30], %45 {strides = array<i32>} : memref<1x1x128xf32, #tpu.memory_space<vmem>>, vector<1x1x128xf32>,
      %cst_31 = arith.constant 0.000000e+00 : f32
      %47 = vector.broadcast %cst_31 : f32 to vector<1x1x128xf32>
      %c0_32 = arith.constant 0 : index
      %c0_33 = arith.constant 0 : index
      %c0_34 = arith.constant 0 : index
      %48 = vector.load %arg10[%c0_32, %c0_33, %c0_34] : memref<1x1x128xf32, #tpu.memory_space<vmem>>, vector<1x1x128xf32>
      tpu.vector_store %arg10[%c0_32, %c0_33, %c0_34], %47 {strides = array<i32>} : memref<1x1x128xf32, #tpu.memory_space<vmem>>, vector<1x1x128xf32>,
      %cst_35 = arith.constant 0.000000e+00 : f32
      %49 = vector.broadcast %cst_35 : f32 to vector<1x1x128xf32>
      %c0_36 = arith.constant 0 : index
      %c0_37 = arith.constant 0 : index
      %c0_38 = arith.constant 0 : index
      %50 = vector.load %arg11[%c0_36, %c0_37, %c0_38] : memref<1x1x128xf32, #tpu.memory_space<vmem>>, vector<1x1x128xf32>
      tpu.vector_store %arg11[%c0_36, %c0_37, %c0_38], %49 {strides = array<i32>} : memref<1x1x128xf32, #tpu.memory_space<vmem>>, vector<1x1x128xf32>,
    } else {
    }
    %c0_i32_2 = arith.constant 0 : i32
    %5 = arith.cmpi eq, %arg2, %c0_i32_2 : i32
    %6 = arith.extui %5 : i1 to i32
    %c0_i32_3 = arith.constant 0 : i32
    %7 = arith.cmpi ne, %6, %c0_i32_3 : i32
    scf.if %7 {
      %c0_27 = arith.constant 0 : index
      %c0_28 = arith.constant 0 : index
      %c0_29 = arith.constant 0 : index
      %45 = vector.load %arg3[%c0_27, %c0_28, %c0_29] : memref<1x4x256xf32, #tpu.memory_space<vmem>>, vector<1x4x256xf32>
      %46 = vector.shape_cast %45 : vector<1x4x256xf32> to vector<4x256xf32>
      %c0_30 = arith.constant 0 : index
      %c0_31 = arith.constant 0 : index
      %c0_32 = arith.constant 0 : index
      %47 = vector.load %arg4[%c0_30, %c0_31, %c0_32] : memref<1x1x256xi32, #tpu.memory_space<vmem>>, vector<1x1x256xi32>
      %48 = vector.shape_cast %47 : vector<1x1x256xi32> to vector<1x256xi32>
      %cst_33 = arith.constant dense<0xFF800000> : vector<256xf32>
      %49 = vector.multi_reduction <maximumf>, %46, %cst_33 [0] : vector<4x256xf32> to vector<256xf32>
      %50 = vector.shape_cast %49 : vector<256xf32> to vector<1x256xf32>
      %51 = vector.broadcast %50 : vector<1x256xf32> to vector<4x256xf32>
      %52 = arith.subf %46, %51 : vector<4x256xf32>
      %53 = math.exp %52 : vector<4x256xf32>
      %cst_34 = arith.constant dense<0.000000e+00> : vector<256xf32>
      %54 = vector.multi_reduction <add>, %53, %cst_34 [0] : vector<4x256xf32> to vector<256xf32>
      %55 = vector.shape_cast %54 : vector<256xf32> to vector<1x256xf32>
      %56 = math.log %55 : vector<1x256xf32>
      %57 = arith.addf %50, %56 : vector<1x256xf32>
      %58 = tpu.iota {dimensions = array<i32: 0>} : vector<4x256xi32>
      %59 = vector.broadcast %48 : vector<1x256xi32> to vector<4x256xi32>
      %60 = arith.cmpi eq, %58, %59 : vector<4x256xi32>
      %cst_35 = arith.constant 0.000000e+00 : f32
      %61 = vector.broadcast %cst_35 : f32 to vector<4x256xf32>
      %62 = arith.select %60, %46, %61 : vector<4x256xi1>, vector<4x256xf32>
      %cst_36 = arith.constant dense<0.000000e+00> : vector<256xf32>
      %63 = vector.multi_reduction <add>, %62, %cst_36 [0] : vector<4x256xf32> to vector<256xf32>
      %64 = vector.shape_cast %63 : vector<256xf32> to vector<1x256xf32>
      %c255_i32 = arith.constant 255 : i32
      %65 = vector.broadcast %c255_i32 : i32 to vector<1x256xi32>
      %66 = arith.cmpi ne, %48, %65 : vector<1x256xi32>
      %67 = arith.extui %66 : vector<1x256xi1> to vector<1x256xi32>
      %68 = arith.sitofp %67 : vector<1x256xi32> to vector<1x256xf32>
      %69 = arith.subf %57, %64 : vector<1x256xf32>
      %70 = arith.mulf %69, %68 : vector<1x256xf32>
      %c0_37 = arith.constant 0 : index
      %c0_38 = arith.constant 0 : index
      %c0_39 = arith.constant 0 : index
      %71 = vector.load %arg9[%c0_37, %c0_38, %c0_39] : memref<1x1x128xf32, #tpu.memory_space<vmem>>, vector<1x1x128xf32>
      %72 = vector.shape_cast %70 : vector<1x256xf32> to vector<1x1x256xf32>
      %cst_40 = arith.constant dense<0.000000e+00> : vector<1xf32>
      %73 = vector.multi_reduction <add>, %72, %cst_40 [1, 2] : vector<1x1x256xf32> to vector<1xf32>
      %74 = vector.shape_cast %73 : vector<1xf32> to vector<1x1x1xf32>
      %75 = vector.extract %74[0, 0, 0] : f32 from vector<1x1x1xf32>
      %76 = vector.broadcast %75 : f32 to vector<1x1x128xf32>
      %77 = arith.addf %71, %76 : vector<1x1x128xf32>
      %c0_41 = arith.constant 0 : index
      %c0_42 = arith.constant 0 : index
      %c0_43 = arith.constant 0 : index
      %78 = vector.load %arg9[%c0_41, %c0_42, %c0_43] : memref<1x1x128xf32, #tpu.memory_space<vmem>>, vector<1x1x128xf32>
      tpu.vector_store %arg9[%c0_41, %c0_42, %c0_43], %77 {strides = array<i32>} : memref<1x1x128xf32, #tpu.memory_space<vmem>>, vector<1x1x128xf32>,
      %c0_44 = arith.constant 0 : index
      %c0_45 = arith.constant 0 : index
      %c0_46 = arith.constant 0 : index
      %79 = vector.load %arg10[%c0_44, %c0_45, %c0_46] : memref<1x1x128xf32, #tpu.memory_space<vmem>>, vector<1x1x128xf32>
      %80 = vector.shape_cast %68 : vector<1x256xf32> to vector<1x1x256xf32>
      %cst_47 = arith.constant dense<0.000000e+00> : vector<1xf32>
      %81 = vector.multi_reduction <add>, %80, %cst_47 [1, 2] : vector<1x1x256xf32> to vector<1xf32>
      %82 = vector.shape_cast %81 : vector<1xf32> to vector<1x1x1xf32>
      %83 = vector.extract %82[0, 0, 0] : f32 from vector<1x1x1xf32>
      %84 = vector.broadcast %83 : f32 to vector<1x1x128xf32>
      %85 = arith.addf %79, %84 : vector<1x1x128xf32>
      %c0_48 = arith.constant 0 : index
      %c0_49 = arith.constant 0 : index
      %c0_50 = arith.constant 0 : index
      %86 = vector.load %arg10[%c0_48, %c0_49, %c0_50] : memref<1x1x128xf32, #tpu.memory_space<vmem>>, vector<1x1x128xf32>
      tpu.vector_store %arg10[%c0_48, %c0_49, %c0_50], %85 {strides = array<i32>} : memref<1x1x128xf32, #tpu.memory_space<vmem>>, vector<1x1x128xf32>,
      %c254_i32_51 = arith.constant 254 : i32
      %87 = vector.broadcast %c254_i32_51 : i32 to vector<1x256xi32>
      %88 = arith.cmpi ne, %48, %87 : vector<1x256xi32>
      %89 = arith.extui %88 : vector<1x256xi1> to vector<1x256xi32>
      %90 = arith.sitofp %89 : vector<1x256xi32> to vector<1x256xf32>
      %91 = tpu.reciprocal %55 {approx = true} : vector<1x256xf32> -> vector<1x256xf32>
      %92 = vector.broadcast %91 : vector<1x256xf32> to vector<4x256xf32>
      %93 = arith.mulf %53, %92 : vector<4x256xf32>
      %94 = vector.broadcast %90 : vector<1x256xf32> to vector<4x256xf32>
      %95 = arith.mulf %93, %94 : vector<4x256xf32>
      %c0_52 = arith.constant 0 : index
      %c0_53 = arith.constant 0 : index
      %96 = vector.load %arg12[%c0_52, %c0_53] : memref<4x256xf32, #tpu.memory_space<vmem>>, vector<4x256xf32>
      tpu.vector_store %arg12[%c0_52, %c0_53], %95 {strides = array<i32>} : memref<4x256xf32, #tpu.memory_space<vmem>>, vector<4x256xf32>,
    } else {
    }
    %c0 = arith.constant 0 : index
    %c0_4 = arith.constant 0 : index
    %c0_5 = arith.constant 0 : index
    %8 = vector.load %arg6[%c0, %c0_4, %c0_5] : memref<1x4x256xf32, #tpu.memory_space<vmem>>, vector<1x4x256xf32>
    %9 = vector.shape_cast %8 : vector<1x4x256xf32> to vector<4x256xf32>
    %c0_6 = arith.constant 0 : index
    %c0_7 = arith.constant 0 : index
    %c0_8 = arith.constant 0 : index
    %10 = vector.load %arg7[%c0_6, %c0_7, %c0_8] : memref<1x1x256xi32, #tpu.memory_space<vmem>>, vector<1x1x256xi32>
    %11 = vector.shape_cast %10 : vector<1x1x256xi32> to vector<1x256xi32>
    %cst = arith.constant dense<0xFF800000> : vector<256xf32>
    %12 = vector.multi_reduction <maximumf>, %9, %cst [0] : vector<4x256xf32> to vector<256xf32>
    %13 = vector.shape_cast %12 : vector<256xf32> to vector<1x256xf32>
    %14 = vector.broadcast %13 : vector<1x256xf32> to vector<4x256xf32>
    %15 = arith.subf %9, %14 : vector<4x256xf32>
    %16 = math.exp %15 : vector<4x256xf32>
    %cst_9 = arith.constant dense<0.000000e+00> : vector<256xf32>
    %17 = vector.multi_reduction <add>, %16, %cst_9 [0] : vector<4x256xf32> to vector<256xf32>
    %18 = vector.shape_cast %17 : vector<256xf32> to vector<1x256xf32>
    %19 = tpu.reciprocal %18 {approx = true} : vector<1x256xf32> -> vector<1x256xf32>
    %20 = vector.broadcast %19 : vector<1x256xf32> to vector<4x256xf32>
    %21 = arith.mulf %16, %20 : vector<4x256xf32>
    %c254_i32 = arith.constant 254 : i32
    %22 = vector.broadcast %c254_i32 : i32 to vector<1x256xi32>
    %23 = arith.cmpi ne, %11, %22 : vector<1x256xi32>
    %24 = arith.extui %23 : vector<1x256xi1> to vector<1x256xi32>
    %25 = arith.sitofp %24 : vector<1x256xi32> to vector<1x256xf32>
    %26 = vector.broadcast %25 : vector<1x256xf32> to vector<4x256xf32>
    %27 = arith.mulf %21, %26 : vector<4x256xf32>
    %c0_10 = arith.constant 0 : index
    %c0_11 = arith.constant 0 : index
    %c0_12 = arith.constant 0 : index
    %28 = vector.load %arg5[%c0_10, %c0_11, %c0_12] : memref<1x8x256xf32, #tpu.memory_space<vmem>>, vector<1x8x256xf32>
    %29 = vector.shape_cast %28 : vector<1x8x256xf32> to vector<8x256xf32>
    %c0_13 = arith.constant 0 : index
    %c0_14 = arith.constant 0 : index
    %c0_15 = arith.constant 0 : index
    %30 = vector.load %arg8[%c0_13, %c0_14, %c0_15] : memref<1x8x256xf32, #tpu.memory_space<vmem>>, vector<1x8x256xf32>
    %31 = vector.shape_cast %30 : vector<1x8x256xf32> to vector<8x256xf32>
    %cst_16 = arith.constant dense<0.000000e+00> : vector<256x256xf32>
    %32 = tpu.matmul %29, %31, %cst_16 {dimension_numbers = #tpu.dot_dimension_numbers<[0], [0], [1], [1], [0, 1, 1, 1], [], []>} : vector<8x256xf32>, vector<8x256xf32>, vector<256x256xf32> -> vector<256x256xf32>
    %33 = math.exp %32 : vector<256x256xf32>
    %c0_17 = arith.constant 0 : index
    %c0_18 = arith.constant 0 : index
    %34 = vector.load %arg12[%c0_17, %c0_18] : memref<4x256xf32, #tpu.memory_space<vmem>>, vector<4x256xf32>
    %cst_19 = arith.constant dense<0.000000e+00> : vector<256x256xf32>
    %35 = tpu.matmul %34, %27, %cst_19 {dimension_numbers = #tpu.dot_dimension_numbers<[0], [0], [1], [1], [0, 1, 1, 1], [], []>} : vector<4x256xf32>, vector<4x256xf32>, vector<256x256xf32> -> vector<256x256xf32>
    %c0_20 = arith.constant 0 : index
    %c0_21 = arith.constant 0 : index
    %c0_22 = arith.constant 0 : index
    %36 = vector.load %arg11[%c0_20, %c0_21, %c0_22] : memref<1x1x128xf32, #tpu.memory_space<vmem>>, vector<1x1x128xf32>
    %37 = arith.mulf %33, %35 : vector<256x256xf32>
    %38 = vector.shape_cast %37 : vector<256x256xf32> to vector<1x256x256xf32>
    %cst_23 = arith.constant dense<0.000000e+00> : vector<1xf32>
    %39 = vector.multi_reduction <add>, %38, %cst_23 [1, 2] : vector<1x256x256xf32> to vector<1xf32>
    %40 = vector.shape_cast %39 : vector<1xf32> to vector<1x1x1xf32>
    %41 = vector.extract %40[0, 0, 0] : f32 from vector<1x1x1xf32>
    %42 = vector.broadcast %41 : f32 to vector<1x1x128xf32>
    %43 = arith.addf %36, %42 : vector<1x1x128xf32>
    %c0_24 = arith.constant 0 : index
    %c0_25 = arith.constant 0 : index
    %c0_26 = arith.constant 0 : index
    %44 = vector.load %arg11[%c0_24, %c0_25, %c0_26] : memref<1x1x128xf32, #tpu.memory_space<vmem>>, vector<1x1x128xf32>
    tpu.vector_store %arg11[%c0_24, %c0_25, %c0_26], %43 {strides = array<i32>} : memref<1x1x128xf32, #tpu.memory_space<vmem>>, vector<1x1x128xf32>,
    return
  }
  func.func @transform_0(%arg0: i32, %arg1: i32, %arg2: i32) -> (i32, i32, i32) {
    %c0_i32 = arith.constant 0 : i32
    %c0_i32_0 = arith.constant 0 : i32
    return %arg0, %c0_i32, %arg1 : i32, i32, i32
  }
  func.func @transform_1(%arg0: i32, %arg1: i32, %arg2: i32) -> (i32, i32, i32) {
    %c0_i32 = arith.constant 0 : i32
    %c0_i32_0 = arith.constant 0 : i32
    return %arg0, %c0_i32, %arg1 : i32, i32, i32
  }
  func.func @transform_2(%arg0: i32, %arg1: i32, %arg2: i32) -> (i32, i32, i32) {
    %c0_i32 = arith.constant 0 : i32
    %c0_i32_0 = arith.constant 0 : i32
    return %arg0, %c0_i32, %arg1 : i32, i32, i32
  }
  func.func @transform_3(%arg0: i32, %arg1: i32, %arg2: i32) -> (i32, i32, i32) {
    %c0_i32 = arith.constant 0 : i32
    %c0_i32_0 = arith.constant 0 : i32
    return %arg0, %c0_i32, %arg2 : i32, i32, i32
  }
  func.func @transform_4(%arg0: i32, %arg1: i32, %arg2: i32) -> (i32, i32, i32) {
    %c0_i32 = arith.constant 0 : i32
    %c0_i32_0 = arith.constant 0 : i32
    return %arg0, %c0_i32, %arg2 : i32, i32, i32
  }
  func.func @transform_5(%arg0: i32, %arg1: i32, %arg2: i32) -> (i32, i32, i32) {
    %c0_i32 = arith.constant 0 : i32
    %c0_i32_0 = arith.constant 0 : i32
    return %arg0, %c0_i32, %arg2 : i32, i32, i32
  }
  func.func @transform_6(%arg0: i32, %arg1: i32, %arg2: i32) -> (i32, i32, i32) {
    %c0_i32 = arith.constant 0 : i32
    %c0_i32_0 = arith.constant 0 : i32
    %c0_i32_1 = arith.constant 0 : i32
    return %arg0, %c0_i32, %c0_i32_0 : i32, i32, i32
  }
  func.func @transform_7(%arg0: i32, %arg1: i32, %arg2: i32) -> (i32, i32, i32) {
    %c0_i32 = arith.constant 0 : i32
    %c0_i32_0 = arith.constant 0 : i32
    %c0_i32_1 = arith.constant 0 : i32
    return %arg0, %c0_i32, %c0_i32_0 : i32, i32, i32
  }
  func.func @transform_8(%arg0: i32, %arg1: i32, %arg2: i32) -> (i32, i32, i32) {
    %c0_i32 = arith.constant 0 : i32
    %c0_i32_0 = arith.constant 0 : i32
    %c0_i32_1 = arith.constant 0 : i32
    return %arg0, %c0_i32, %c0_i32_0 : i32, i32, i32
  }
}

</mosaic_0001>

<llo_original>
// kernel: tpu_custom_call.1
$region0: #{tpu_custom_call.1}
  #allocation0 [shape = 'u32[]', space=smem, size = 0x4, offset = 0x4, fixed_abs, tag = 'smem constant byte address 0x4 - core index']
  #allocation1 [shape = 'u32[72,128]{1,0:T(1,128)}', space=vmem, size = 0x9000, scoped, tag = 'internal scratch']
  #allocation2 [shape = 'f32[4,256]{1,0:T(4,128)}', space=vmem, size = 0x1000, scoped, tag = 'scratch operand']
  %s0 = inlined_call_operand.hbm [shape: f32[2,4,256], index: 0, kind: input, shape index: {}]
  %s1 = inlined_call_operand.hbm [shape: s32[2,1,256], index: 1, kind: input, shape index: {}]
  %s2 = inlined_call_operand.hbm [shape: f32[2,8,256], index: 2, kind: input, shape index: {}]
  %s3 = inlined_call_operand.hbm [shape: f32[2,4,256], index: 3, kind: input, shape index: {}]
  %s4 = inlined_call_operand.hbm [shape: s32[2,1,256], index: 4, kind: input, shape index: {}]
  %s5 = inlined_call_operand.hbm [shape: f32[2,8,256], index: 5, kind: input, shape index: {}]
  %s6 = inlined_call_operand.hbm [shape: f32[2,1,128], index: 6, kind: output, shape index: {0}]
  %s7 = inlined_call_operand.hbm [shape: f32[2,1,128], index: 7, kind: output, shape index: {1}]
  %s8 = inlined_call_operand.hbm [shape: f32[2,1,128], index: 8, kind: output, shape index: {2}]
  %9 = xla_tuple %s6, %s7, %s8
  %s10 = sld [smem:[#allocation0]]
  $region105: #{tpu_custom_call.1} parent=0
    _
  %s12 = ssub.s32 1, %s10
  %s13 = scalar_select 0, %s12, %s10
  $region1: #{tpu_custom_call.1} parent=0
    #allocation3 [shape = 'u8[8192]{0}', space=vmem, size = 0x2000, scoped, tag = 'input window, operand 0']
    #allocation4 [shape = 's32[2]{0}', space=sflag, size = 0x8, scoped, tag = 'scoped memory for tpu_custom_call.1']
    #allocation5 [shape = 's32[2]{0}', space=sflag, size = 0x8, scoped, tag = 'scoped memory for tpu_custom_call.1']
    #allocation6 [shape = 'u8[2048]{0}', space=vmem, size = 0x800, scoped, tag = 'input window, operand 1']
    #allocation7 [shape = 's32[2]{0}', space=sflag, size = 0x8, scoped, tag = 'scoped memory for tpu_custom_call.1']
    #allocation8 [shape = 'u8[16384]{0}', space=vmem, size = 0x4000, scoped, tag = 'input window, operand 2']
    #allocation9 [shape = 'u8[8192]{0}', space=vmem, size = 0x2000, scoped, tag = 'input window, operand 3']
    #allocation10 [shape = 's32[2]{0}', space=sflag, size = 0x8, scoped, tag = 'scoped memory for tpu_custom_call.1']
    #allocation11 [shape = 'u8[2048]{0}', space=vmem, size = 0x800, scoped, tag = 'input window, operand 4']
    #allocation12 [shape = 'u8[16384]{0}', space=vmem, size = 0x4000, scoped, tag = 'input window, operand 5']
    #allocation13 [shape = 's32[2]{0}', space=sflag, size = 0x8, scoped, tag = 'scoped memory for tpu_custom_call.1']
    #allocation14 [shape = 'u8[1024]{0}', space=vmem, size = 0x400, scoped, tag = 'output window, operand 0']
    #allocation15 [shape = 'u8[1024]{0}', space=vmem, size = 0x400, scoped, tag = 'output window, operand 1']
    #allocation16 [shape = 's32[2]{0}', space=sflag, size = 0x8, scoped, tag = 'scoped memory for tpu_custom_call.1']
    #allocation17 [shape = 'u8[1024]{0}', space=vmem, size = 0x400, scoped, tag = 'output window, operand 2']
    %14 = vsyncpa [#allocation4], 0
    %s15 = scalar_lea.sflag [#allocation4], 1
    %16 = vsyncpa %s15, 0
    %17 = vsyncpa [#allocation7], 0
    %s18 = scalar_lea.sflag [#allocation7], 1
    %19 = vsyncpa %s18, 0
    %20 = vsyncpa [#allocation10], 0
    %s21 = scalar_lea.sflag [#allocation10], 1
    %22 = vsyncpa %s21, 0
    %23 = vsyncpa [#allocation13], 0
    %s24 = scalar_lea.sflag [#allocation13], 1
    %25 = vsyncpa %s24, 0
    %26 = vsyncpa [#allocation5], 0
    %s27 = scalar_lea.sflag [#allocation5], 1
    %28 = vsyncpa %s27, 0
    %29 = vsyncpa [#allocation16], 0
    %s30 = scalar_lea.sflag [#allocation16], 1
    %31 = vsyncpa %s30, 0
    loop: start=0, step=1, limit=4
    $region2: #{tpu_custom_call.1} parent=1 // loop_pre_header
      _
    $region3: #{tpu_custom_call.1} parent=1 // loop_header
      %s33 = sphi 0, %s37
      %p34 = scmp.ge.s32.totalorder %s33, 4
      %s40 = sphi 0, %s59
      %s41 = sphi 0, %s55
      %s42 = sphi 0, %s51
      %s43 = sphi 0, %s40
      %s44 = sphi 0, %s41
      %s45 = sphi 0, %s42
      %s46 = sphi 0, %s43
      %s47 = sphi 0, %s44
      %s48 = sphi 0, %s45
      %s64 = sphi 0, %s66
      %s67 = sphi 0, %s64
      %s68 = sphi 0, %s67
      %s84 = sphi 0, %s68
      %s92 = sphi 0, %s94
      %s95 = sphi 0, %s92
      %s96 = sphi 0, %s95
      %s112 = sphi 0, %s96
      %s120 = sphi 0, %s122
      %s123 = sphi 0, %s120
      %s124 = sphi 0, %s123
      %s140 = sphi 0, %s124
      %s148 = sphi 0, %s150
      %s151 = sphi 0, %s148
      %s152 = sphi 0, %s151
      %s168 = sphi 0, %s152
      %s176 = sphi 0, %s178
      %s179 = sphi 0, %s176
      %s180 = sphi 0, %s179
      %s196 = sphi 0, %s180
      %s204 = sphi 0, %s206
      %s207 = sphi 0, %s204
      %s208 = sphi 0, %s207
      %s224 = sphi 0, %s208
      %s230 = sphi 0, %s232
      %s233 = sphi 0, %s230
      %s234 = sphi 0, %s233
      %s250 = sphi 0, %s234
      %s256 = sphi 0, %s258
      %s259 = sphi 0, %s256
      %s260 = sphi 0, %s259
      %s276 = sphi 0, %s260
      %s282 = sphi 0, %s284
      %s285 = sphi 0, %s282
      %s286 = sphi 0, %s285
      %s302 = sphi 0, %s286
    $region4: #{tpu_custom_call.1} parent=1 // loop_header_branch
      %36 = sbr.rel (%p34) target = $region8
    $region5: #{tpu_custom_call.1} parent=1 // loop_body
      %s38 = ssub.s32 %s33, 1
      %s39 = ssub.s32 %s33, 2
      %s49 = sadd.s32 1, %s42
      %p50 = scmp.ge.s32.totalorder %s49, 1
      %s51 = scalar_select %p50, 0, %s49
      %s52 = sadd.s32 1, %s41
      %s53 = scalar_select %p50, %s52, %s41
      %p54 = scmp.ge.s32.totalorder %s53, 1
      %s55 = scalar_select %p54, 0, %s53
      %s56 = sadd.s32 1, %s40
      %s57 = scalar_select %p54, %s56, %s40
      %p58 = scmp.ge.s32.totalorder %s57, 2
      %s59 = scalar_select %p58, 0, %s57
      %s60 = ssub.s32 %s40, %s59
      %s61 = ssub.s32 %s41, %s55
      %s62 = sor.u32 %s60, %s61
      %p63 = scmp.eq.s32.totalorder %s62, 0
      %s65 = sadd.s32 %s64, 1
      %s66 = scalar_select %p63, %s64, %s65
      %p69 = pneg %p63
      %p70 = scmp.eq.s32.totalorder %s33, 1
      %p71 = por %p69, %p70
      %p72 = scmp.ne.s32.totalorder %s64, %s67
      %p73 = scmp.eq.s32.totalorder %s33, 0
      %p74 = por %p72, %p73
      %p75 = scmp.ne.s32.totalorder %s64, %s67
      %p76 = scmp.eq.s32.totalorder %s38, 1
      %p77 = por %p75, %p76
      %p78 = scmp.ne.s32.totalorder %s67, %s68
      %p79 = scmp.eq.s32.totalorder %s38, 0
      %p80 = por %p78, %p79
      %p81 = scmp.ne.s32.totalorder %s67, %s68
      %p82 = scmp.eq.s32.totalorder %s39, 1
      %p83 = por %p81, %p82
      %p85 = scmp.ne.s32.totalorder %s68, %s84
      %p86 = scmp.eq.s32.totalorder %s39, 0
      %p87 = por %p85, %p86
      %s88 = ssub.s32 %s40, %s59
      %s89 = ssub.s32 %s41, %s55
      %s90 = sor.u32 %s88, %s89
      %p91 = scmp.eq.s32.totalorder %s90, 0
      %s93 = sadd.s32 %s92, 1
      %s94 = scalar_select %p91, %s92, %s93
      %p97 = pneg %p91
      %p98 = scmp.eq.s32.totalorder %s33, 1
      %p99 = por %p97, %p98
      %p100 = scmp.ne.s32.totalorder %s92, %s95
      %p101 = scmp.eq.s32.totalorder %s33, 0
      %p102 = por %p100, %p101
      %p103 = scmp.ne.s32.totalorder %s92, %s95
      %p104 = scmp.eq.s32.totalorder %s38, 1
      %p105 = por %p103, %p104
      %p106 = scmp.ne.s32.totalorder %s95, %s96
      %p107 = scmp.eq.s32.totalorder %s38, 0
      %p108 = por %p106, %p107
      %p109 = scmp.ne.s32.totalorder %s95, %s96
      %p110 = scmp.eq.s32.totalorder %s39, 1
      %p111 = por %p109, %p110
      %p113 = scmp.ne.s32.totalorder %s96, %s112
      %p114 = scmp.eq.s32.totalorder %s39, 0
      %p115 = por %p113, %p114
      %s116 = ssub.s32 %s40, %s59
      %s117 = ssub.s32 %s41, %s55
      %s118 = sor.u32 %s116, %s117
      %p119 = scmp.eq.s32.totalorder %s118, 0
      %s121 = sadd.s32 %s120, 1
      %s122 = scalar_select %p119, %s120, %s121
      %p125 = pneg %p119
      %p126 = scmp.eq.s32.totalorder %s33, 1
      %p127 = por %p125, %p126
      %p128 = scmp.ne.s32.totalorder %s120, %s123
      %p129 = scmp.eq.s32.totalorder %s33, 0
      %p130 = por %p128, %p129
      %p131 = scmp.ne.s32.totalorder %s120, %s123
      %p132 = scmp.eq.s32.totalorder %s38, 1
      %p133 = por %p131, %p132
      %p134 = scmp.ne.s32.totalorder %s123, %s124
      %p135 = scmp.eq.s32.totalorder %s38, 0
      %p136 = por %p134, %p135
      %p137 = scmp.ne.s32.totalorder %s123, %s124
      %p138 = scmp.eq.s32.totalorder %s39, 1
      %p139 = por %p137, %p138
      %p141 = scmp.ne.s32.totalorder %s124, %s140
      %p142 = scmp.eq.s32.totalorder %s39, 0
      %p143 = por %p141, %p142
      %s144 = ssub.s32 %s40, %s59
      %s145 = ssub.s32 %s42, %s51
      %s146 = sor.u32 %s144, %s145
      %p147 = scmp.eq.s32.totalorder %s146, 0
      %s149 = sadd.s32 %s148, 1
      %s150 = scalar_select %p147, %s148, %s149
      %p153 = pneg %p147
      %p154 = scmp.eq.s32.totalorder %s33, 1
      %p155 = por %p153, %p154
      %p156 = scmp.ne.s32.totalorder %s148, %s151
      %p157 = scmp.eq.s32.totalorder %s33, 0
      %p158 = por %p156, %p157
      %p159 = scmp.ne.s32.totalorder %s148, %s151
      %p160 = scmp.eq.s32.totalorder %s38, 1
      %p161 = por %p159, %p160
      %p162 = scmp.ne.s32.totalorder %s151, %s152
      %p163 = scmp.eq.s32.totalorder %s38, 0
      %p164 = por %p162, %p163
      %p165 = scmp.ne.s32.totalorder %s151, %s152
      %p166 = scmp.eq.s32.totalorder %s39, 1
      %p167 = por %p165, %p166
      %p169 = scmp.ne.s32.totalorder %s152, %s168
      %p170 = scmp.eq.s32.totalorder %s39, 0
      %p171 = por %p169, %p170
      %s172 = ssub.s32 %s40, %s59
      %s173 = ssub.s32 %s42, %s51
      %s174 = sor.u32 %s172, %s173
      %p175 = scmp.eq.s32.totalorder %s174, 0
      %s177 = sadd.s32 %s176, 1
      %s178 = scalar_select %p175, %s176, %s177
      %p181 = pneg %p175
      %p182 = scmp.eq.s32.totalorder %s33, 1
      %p183 = por %p181, %p182
      %p184 = scmp.ne.s32.totalorder %s176, %s179
      %p185 = scmp.eq.s32.totalorder %s33, 0
      %p186 = por %p184, %p185
      %p187 = scmp.ne.s32.totalorder %s176, %s179
      %p188 = scmp.eq.s32.totalorder %s38, 1
      %p189 = por %p187, %p188
      %p190 = scmp.ne.s32.totalorder %s179, %s180
      %p191 = scmp.eq.s32.totalorder %s38, 0
      %p192 = por %p190, %p191
      %p193 = scmp.ne.s32.totalorder %s179, %s180
      %p194 = scmp.eq.s32.totalorder %s39, 1
      %p195 = por %p193, %p194
      %p197 = scmp.ne.s32.totalorder %s180, %s196
      %p198 = scmp.eq.s32.totalorder %s39, 0
      %p199 = por %p197, %p198
      %s200 = ssub.s32 %s40, %s59
      %s201 = ssub.s32 %s42, %s51
      %s202 = sor.u32 %s200, %s201
      %p203 = scmp.eq.s32.totalorder %s202, 0
      %s205 = sadd.s32 %s204, 1
      %s206 = scalar_select %p203, %s204, %s205
      %p209 = pneg %p203
      %p210 = scmp.eq.s32.totalorder %s33, 1
      %p211 = por %p209, %p210
      %p212 = scmp.ne.s32.totalorder %s204, %s207
      %p213 = scmp.eq.s32.totalorder %s33, 0
      %p214 = por %p212, %p213
      %p215 = scmp.ne.s32.totalorder %s204, %s207
      %p216 = scmp.eq.s32.totalorder %s38, 1
      %p217 = por %p215, %p216
      %p218 = scmp.ne.s32.totalorder %s207, %s208
      %p219 = scmp.eq.s32.totalorder %s38, 0
      %p220 = por %p218, %p219
      %p221 = scmp.ne.s32.totalorder %s207, %s208
      %p222 = scmp.eq.s32.totalorder %s39, 1
      %p223 = por %p221, %p222
      %p225 = scmp.ne.s32.totalorder %s208, %s224
      %p226 = scmp.eq.s32.totalorder %s39, 0
      %p227 = por %p225, %p226
      %s228 = ssub.s32 %s40, %s59
      %p229 = scmp.eq.s32.totalorder %s228, 0
      %s231 = sadd.s32 %s230, 1
      %s232 = scalar_select %p229, %s230, %s231
      %p235 = pneg %p229
      %p236 = scmp.eq.s32.totalorder %s33, 1
      %p237 = por %p235, %p236
      %p238 = scmp.ne.s32.totalorder %s230, %s233
      %p239 = scmp.eq.s32.totalorder %s33, 0
      %p240 = por %p238, %p239
      %p241 = scmp.ne.s32.totalorder %s230, %s233
      %p242 = scmp.eq.s32.totalorder %s38, 1
      %p243 = por %p241, %p242
      %p244 = scmp.ne.s32.totalorder %s233, %s234
      %p245 = scmp.eq.s32.totalorder %s38, 0
      %p246 = por %p244, %p245
      %p247 = scmp.ne.s32.totalorder %s233, %s234
      %p248 = scmp.eq.s32.totalorder %s39, 1
      %p249 = por %p247, %p248
      %p251 = scmp.ne.s32.totalorder %s234, %s250
      %p252 = scmp.eq.s32.totalorder %s39, 0
      %p253 = por %p251, %p252
      %s254 = ssub.s32 %s40, %s59
      %p255 = scmp.eq.s32.totalorder %s254, 0
      %s257 = sadd.s32 %s256, 1
      %s258 = scalar_select %p255, %s256, %s257
      %p261 = pneg %p255
      %p262 = scmp.eq.s32.totalorder %s33, 1
      %p263 = por %p261, %p262
      %p264 = scmp.ne.s32.totalorder %s256, %s259
      %p265 = scmp.eq.s32.totalorder %s33, 0
      %p266 = por %p264, %p265
      %p267 = scmp.ne.s32.totalorder %s256, %s259
      %p268 = scmp.eq.s32.totalorder %s38, 1
      %p269 = por %p267, %p268
      %p270 = scmp.ne.s32.totalorder %s259, %s260
      %p271 = scmp.eq.s32.totalorder %s38, 0
      %p272 = por %p270, %p271
      %p273 = scmp.ne.s32.totalorder %s259, %s260
      %p274 = scmp.eq.s32.totalorder %s39, 1
      %p275 = por %p273, %p274
      %p277 = scmp.ne.s32.totalorder %s260, %s276
      %p278 = scmp.eq.s32.totalorder %s39, 0
      %p279 = por %p277, %p278
      %s280 = ssub.s32 %s40, %s59
      %p281 = scmp.eq.s32.totalorder %s280, 0
      %s283 = sadd.s32 %s282, 1
      %s284 = scalar_select %p281, %s282, %s283
      %p287 = pneg %p281
      %p288 = scmp.eq.s32.totalorder %s33, 1
      %p289 = por %p287, %p288
      %p290 = scmp.ne.s32.totalorder %s282, %s285
      %p291 = scmp.eq.s32.totalorder %s33, 0
      %p292 = por %p290, %p291
      %p293 = scmp.ne.s32.totalorder %s282, %s285
      %p294 = scmp.eq.s32.totalorder %s38, 1
      %p295 = por %p293, %p294
      %p296 = scmp.ne.s32.totalorder %s285, %s286
      %p297 = scmp.eq.s32.totalorder %s38, 0
      %p298 = por %p296, %p297
      %p299 = scmp.ne.s32.totalorder %s285, %s286
      %p300 = scmp.eq.s32.totalorder %s39, 1
      %p301 = por %p299, %p300
      %p303 = scmp.ne.s32.totalorder %s286, %s302
      %p304 = scmp.eq.s32.totalorder %s39, 0
      %p305 = por %p303, %p304
      %p306 = scmp.le.s32.totalorder 1, %s33
      %p307 = scmp.lt.s32.totalorder %s33, 3
      %p308 = pnand %p306, %p307
      %p309 = pneg %p308
      // Predicated region
      $region9: #{tpu_custom_call.1} parent=5 // pred_check
        _
      $region10: #{tpu_custom_call.1} parent=5 // pred_check_branch
        %311 = sbr.rel (%p308) target = $region12
      $region11: #{tpu_custom_call.1} parent=5 // pred_region
        %s312 = ssub.s32 %s33, 1
      $region12: #{tpu_custom_call.1} parent=5 // pred_fallthru
        _
      %p313 = scmp.lt.s32.totalorder %s33, 2
      // Predicated region
      $region13: #{tpu_custom_call.1} parent=5 // pred_check
        %p314 = pneg %p313
      $region14: #{tpu_custom_call.1} parent=5 // pred_check_branch
        %316 = sbr.rel (%p314) target = $region16
      $region15: #{tpu_custom_call.1} parent=5 // pred_region
        // Predicated region
        $region17: #{tpu_custom_call.1} parent=15 // pred_check
          %p317 = pneg %p74
        $region18: #{tpu_custom_call.1} parent=15 // pred_check_branch
          %319 = sbr.rel (%p317) target = $region20
        $region19: #{tpu_custom_call.1} parent=15 // pred_region
          %s320 = sand.u32 %s64, 1
          %s321 = scalar_lea.sflag [#allocation4], %s320
          %s322 = sand.u32 %s64, 1
          %s323 = smul.addr %s322, 8
          %s324 = scalar_lea.vmem [#allocation3], %s323
          %s325 = smul.u32 2, %s41
          %327 = vsyncadd %s321, 0
          %s328 = smul.addr %s40, 2
          %s329 = sadd.s32 %s325, %s328
          %s330 = smul.addr %s329, 4
          %s331 = scalar_lea.hbm %s0, %s330
          %s333 = sshll.u32 %s331, 4
          %s334 = int_to_ptr.hbm [resolvable:$true] %s333
          %s335 = sshll.u32 %s324, 4
          %s336 = int_to_ptr.vmem [resolvable:$true] %s335
          %338 = dma.hbm_to_vmem [thread:$0]  %s334, 128, %s336, %s321
        $region20: #{tpu_custom_call.1} parent=15 // pred_fallthru
          _
        // Predicated region
        $region21: #{tpu_custom_call.1} parent=15 // pred_check
          %p339 = pneg %p102
        $region22: #{tpu_custom_call.1} parent=15 // pred_check_branch
          %341 = sbr.rel (%p339) target = $region24
        $region23: #{tpu_custom_call.1} parent=15 // pred_region
          %s342 = sand.u32 %s33, 1
          %s343 = scalar_lea.sflag [#allocation7], %s342
          %s344 = sand.u32 %s92, 1
          %s345 = smul.addr %s344, 2
          %s346 = scalar_lea.vmem [#allocation6], %s345
          %s347 = smul.u32 2, %s41
          %349 = vsyncadd %s343, 0
          %s350 = smul.addr %s40, 2
          %s351 = sadd.s32 %s347, %s350
          %s352 = scalar_lea.hbm %s1, %s351
          %s354 = sshll.u32 %s352, 4
          %s355 = int_to_ptr.hbm [resolvable:$true] %s354
          %s356 = sshll.u32 %s346, 4
          %s357 = int_to_ptr.vmem [resolvable:$true] %s356
          %359 = dma.hbm_to_vmem [thread:$0]  %s355, 32, %s357, %s343
        $region24: #{tpu_custom_call.1} parent=15 // pred_fallthru
          _
        // Predicated region
        $region25: #{tpu_custom_call.1} parent=15 // pred_check
          %p360 = pneg %p130
        $region26: #{tpu_custom_call.1} parent=15 // pred_check_branch
          %362 = sbr.rel (%p360) target = $region28
        $region27: #{tpu_custom_call.1} parent=15 // pred_region
          %s363 = sand.u32 %s33, 1
          %s364 = scalar_lea.sflag [#allocation7], %s363
          %s365 = sand.u32 %s120, 1
          %s366 = smul.addr %s365, 16
          %s367 = scalar_lea.vmem [#allocation8], %s366
          %s368 = smul.u32 2, %s41
          %370 = vsyncadd %s364, 0
          %s371 = smul.addr %s40, 2
          %s372 = sadd.s32 %s368, %s371
          %s373 = smul.addr %s372, 8
          %s374 = scalar_lea.hbm %s2, %s373
          %s376 = sshll.u32 %s374, 4
          %s377 = int_to_ptr.hbm [resolvable:$true] %s376
          %s378 = sshll.u32 %s367, 4
          %s379 = int_to_ptr.vmem [resolvable:$true] %s378
          %381 = dma.hbm_to_vmem [thread:$0]  %s377, 256, %s379, %s364
        $region28: #{tpu_custom_call.1} parent=15 // pred_fallthru
          _
        // Predicated region
        $region29: #{tpu_custom_call.1} parent=15 // pred_check
          %p382 = pneg %p158
        $region30: #{tpu_custom_call.1} parent=15 // pred_check_branch
          %384 = sbr.rel (%p382) target = $region32
        $region31: #{tpu_custom_call.1} parent=15 // pred_region
          %s385 = sand.u32 %s33, 1
          %s386 = scalar_lea.sflag [#allocation10], %s385
          %s387 = sand.u32 %s148, 1
          %s388 = smul.addr %s387, 8
          %s389 = scalar_lea.vmem [#allocation9], %s388
          %s390 = smul.u32 2, %s42
          %392 = vsyncadd %s386, 0
          %s393 = smul.addr %s40, 2
          %s394 = sadd.s32 %s390, %s393
          %s395 = smul.addr %s394, 4
          %s396 = scalar_lea.hbm %s3, %s395
          %s398 = sshll.u32 %s396, 4
          %s399 = int_to_ptr.hbm [resolvable:$true] %s398
          %s400 = sshll.u32 %s389, 4
          %s401 = int_to_ptr.vmem [resolvable:$true] %s400
          %403 = dma.hbm_to_vmem [thread:$0]  %s399, 128, %s401, %s386
        $region32: #{tpu_custom_call.1} parent=15 // pred_fallthru
          _
        // Predicated region
        $region33: #{tpu_custom_call.1} parent=15 // pred_check
          %p404 = pneg %p186
        $region34: #{tpu_custom_call.1} parent=15 // pred_check_branch
          %406 = sbr.rel (%p404) target = $region36
        $region35: #{tpu_custom_call.1} parent=15 // pred_region
          %s407 = sand.u32 %s33, 1
          %s408 = scalar_lea.sflag [#allocation10], %s407
          %s409 = sand.u32 %s176, 1
          %s410 = smul.addr %s409, 2
          %s411 = scalar_lea.vmem [#allocation11], %s410
          %s412 = smul.u32 2, %s42
          %414 = vsyncadd %s408, 0
          %s415 = smul.addr %s40, 2
          %s416 = sadd.s32 %s412, %s415
          %s417 = scalar_lea.hbm %s4, %s416
          %s419 = sshll.u32 %s417, 4
          %s420 = int_to_ptr.hbm [resolvable:$true] %s419
          %s421 = sshll.u32 %s411, 4
          %s422 = int_to_ptr.vmem [resolvable:$true] %s421
          %424 = dma.hbm_to_vmem [thread:$0]  %s420, 32, %s422, %s408
        $region36: #{tpu_custom_call.1} parent=15 // pred_fallthru
          _
        // Predicated region
        $region37: #{tpu_custom_call.1} parent=15 // pred_check
          %p425 = pneg %p214
        $region38: #{tpu_custom_call.1} parent=15 // pred_check_branch
          %427 = sbr.rel (%p425) target = $region40
        $region39: #{tpu_custom_call.1} parent=15 // pred_region
          %s428 = sand.u32 %s204, 1
          %s429 = scalar_lea.sflag [#allocation13], %s428
          %s430 = sand.u32 %s204, 1
          %s431 = smul.addr %s430, 16
          %s432 = scalar_lea.vmem [#allocation12], %s431
          %s433 = smul.u32 2, %s42
          %435 = vsyncadd %s429, 0
          %s436 = smul.addr %s40, 2
          %s437 = sadd.s32 %s433, %s436
          %s438 = smul.addr %s437, 8
          %s439 = scalar_lea.hbm %s5, %s438
          %s441 = sshll.u32 %s439, 4
          %s442 = int_to_ptr.hbm [resolvable:$true] %s441
          %s443 = sshll.u32 %s432, 4
          %s444 = int_to_ptr.vmem [resolvable:$true] %s443
          %446 = dma.hbm_to_vmem [thread:$0]  %s442, 256, %s444, %s429
        $region40: #{tpu_custom_call.1} parent=15 // pred_fallthru
          _
      $region16: #{tpu_custom_call.1} parent=5 // pred_fallthru
        _
      %p447 = scmp.le.s32.totalorder 1, %s33
      %p448 = scmp.lt.s32.totalorder %s33, 3
      %p449 = pnand %p447, %p448
      %p450 = pneg %p449
      // Predicated region
      $region41: #{tpu_custom_call.1} parent=5 // pred_check
        _
      $region42: #{tpu_custom_call.1} parent=5 // pred_check_branch
        %452 = sbr.rel (%p449) target = $region44
      $region43: #{tpu_custom_call.1} parent=5 // pred_region
        %s453 = ssub.s32 %s33, 1
        %s454 = sand.u32 %s67, 1
        %s455 = scalar_lea.sflag [#allocation4], %s454
        %s456 = sand.u32 %s67, 1
        %s457 = smul.addr %s456, 8
        %s458 = scalar_lea.vmem [#allocation3], %s457
        // Predicated region
        $region45: #{tpu_custom_call.1} parent=43 // pred_check
          %p459 = pneg %p80
        $region46: #{tpu_custom_call.1} parent=43 // pred_check_branch
          %461 = sbr.rel (%p459) target = $region48
        $region47: #{tpu_custom_call.1} parent=43 // pred_region
          %463 = dma.done %s455, 128
        $region48: #{tpu_custom_call.1} parent=43 // pred_fallthru
          _
        %s464 = sand.u32 %s38, 1
        %s465 = scalar_lea.sflag [#allocation7], %s464
        %s466 = sand.u32 %s95, 1
        %s467 = smul.addr %s466, 2
        %s468 = scalar_lea.vmem [#allocation6], %s467
        // Predicated region
        $region49: #{tpu_custom_call.1} parent=43 // pred_check
          %p469 = pneg %p108
        $region50: #{tpu_custom_call.1} parent=43 // pred_check_branch
          %471 = sbr.rel (%p469) target = $region52
        $region51: #{tpu_custom_call.1} parent=43 // pred_region
          %473 = dma.done %s465, 32
        $region52: #{tpu_custom_call.1} parent=43 // pred_fallthru
          _
        %s474 = sand.u32 %s38, 1
        %s475 = scalar_lea.sflag [#allocation7], %s474
        %s476 = sand.u32 %s123, 1
        %s477 = smul.addr %s476, 16
        %s478 = scalar_lea.vmem [#allocation8], %s477
        // Predicated region
        $region53: #{tpu_custom_call.1} parent=43 // pred_check
          %p479 = pneg %p136
        $region54: #{tpu_custom_call.1} parent=43 // pred_check_branch
          %481 = sbr.rel (%p479) target = $region56
        $region55: #{tpu_custom_call.1} parent=43 // pred_region
          %483 = dma.done %s475, 256
        $region56: #{tpu_custom_call.1} parent=43 // pred_fallthru
          _
        %s484 = sand.u32 %s38, 1
        %s485 = scalar_lea.sflag [#allocation10], %s484
        %s486 = sand.u32 %s151, 1
        %s487 = smul.addr %s486, 8
        %s488 = scalar_lea.vmem [#allocation9], %s487
        // Predicated region
        $region57: #{tpu_custom_call.1} parent=43 // pred_check
          %p489 = pneg %p164
        $region58: #{tpu_custom_call.1} parent=43 // pred_check_branch
          %491 = sbr.rel (%p489) target = $region60
        $region59: #{tpu_custom_call.1} parent=43 // pred_region
          %493 = dma.done %s485, 128
        $region60: #{tpu_custom_call.1} parent=43 // pred_fallthru
          _
        %s494 = sand.u32 %s38, 1
        %s495 = scalar_lea.sflag [#allocation10], %s494
        %s496 = sand.u32 %s179, 1
        %s497 = smul.addr %s496, 2
        %s498 = scalar_lea.vmem [#allocation11], %s497
        // Predicated region
        $region61: #{tpu_custom_call.1} parent=43 // pred_check
          %p499 = pneg %p192
        $region62: #{tpu_custom_call.1} parent=43 // pred_check_branch
          %501 = sbr.rel (%p499) target = $region64
        $region63: #{tpu_custom_call.1} parent=43 // pred_region
          %503 = dma.done %s495, 32
        $region64: #{tpu_custom_call.1} parent=43 // pred_fallthru
          _
        %s504 = sand.u32 %s207, 1
        %s505 = scalar_lea.sflag [#allocation13], %s504
        %s506 = sand.u32 %s207, 1
        %s507 = smul.addr %s506, 16
        %s508 = scalar_lea.vmem [#allocation12], %s507
        // Predicated region
        $region65: #{tpu_custom_call.1} parent=43 // pred_check
          %p509 = pneg %p220
        $region66: #{tpu_custom_call.1} parent=43 // pred_check_branch
          %511 = sbr.rel (%p509) target = $region68
        $region67: #{tpu_custom_call.1} parent=43 // pred_region
          %513 = dma.done %s505, 256
        $region68: #{tpu_custom_call.1} parent=43 // pred_fallthru
          _
        %s514 = sand.u32 %s67, 1
        %s515 = scalar_lea.sflag [#allocation4], %s514
        %s516 = sand.u32 %s67, 1
        %s517 = smul.addr %s516, 8
        %s518 = scalar_lea.vmem [#allocation3], %s517
        %p519 = pneg %p80
        %p520 = pneg %p77
        %s521 = sand.u32 %s38, 1
        %s522 = scalar_lea.sflag [#allocation7], %s521
        %s523 = sand.u32 %s95, 1
        %s524 = smul.addr %s523, 2
        %s525 = scalar_lea.vmem [#allocation6], %s524
        %p526 = pneg %p108
        %p527 = pneg %p105
        %s528 = sand.u32 %s38, 1
        %s529 = scalar_lea.sflag [#allocation7], %s528
        %s530 = sand.u32 %s123, 1
        %s531 = smul.addr %s530, 16
        %s532 = scalar_lea.vmem [#allocation8], %s531
        %p533 = pneg %p136
        %p534 = pneg %p133
        %s535 = sand.u32 %s38, 1
        %s536 = scalar_lea.sflag [#allocation10], %s535
        %s537 = sand.u32 %s151, 1
        %s538 = smul.addr %s537, 8
        %s539 = scalar_lea.vmem [#allocation9], %s538
        %p540 = pneg %p164
        %p541 = pneg %p161
        %s542 = sand.u32 %s38, 1
        %s543 = scalar_lea.sflag [#allocation10], %s542
        %s544 = sand.u32 %s179, 1
        %s545 = smul.addr %s544, 2
        %s546 = scalar_lea.vmem [#allocation11], %s545
        %p547 = pneg %p192
        %p548 = pneg %p189
        %s549 = sand.u32 %s207, 1
        %s550 = scalar_lea.sflag [#allocation13], %s549
        %s551 = sand.u32 %s207, 1
        %s552 = smul.addr %s551, 16
        %s553 = scalar_lea.vmem [#allocation12], %s552
        %p554 = pneg %p220
        %p555 = pneg %p217
        %p556 = pneg %p246
        %p557 = pneg %p243
        %s558 = sand.u32 %s233, 1
        %s559 = scalar_lea.sflag [#allocation5], %s558
        %s560 = sand.u32 %s233, 1
        %s561 = scalar_lea.vmem [#allocation14], %s560
        %p562 = pneg %p272
        %p563 = pneg %p269
        %s564 = sand.u32 %s38, 1
        %s565 = scalar_lea.sflag [#allocation16], %s564
        %s566 = sand.u32 %s259, 1
        %s567 = scalar_lea.vmem [#allocation15], %s566
        %p568 = pneg %p298
        %p569 = pneg %p295
        %s570 = sand.u32 %s38, 1
        %s571 = scalar_lea.sflag [#allocation16], %s570
        %s572 = sand.u32 %s285, 1
        %s573 = scalar_lea.vmem [#allocation17], %s572
        %s574 = smul.u32 2, %s44
        %s575 = smul.u32 2, %s44
        %s576 = smul.u32 2, %s44
        %s577 = smul.u32 2, %s45
        %s578 = smul.u32 2, %s45
        %s579 = smul.u32 2, %s45
        %p580 = scmp.eq.s32.totalorder %s44, 0
        %p581 = scmp.eq.s32.totalorder %s45, 0
        %p582 = pnand %p580, %p581
        %p583 = pneg %p582
        // Predicated region
        $region69: #{tpu_custom_call.1} parent=43 // pred_check
          _
        $region70: #{tpu_custom_call.1} parent=43 // pred_check_branch
          %585 = sbr.rel (%p582) target = $region72
        $region71: #{tpu_custom_call.1} parent=43 // pred_region
          %586 = vst [vmem:[%s561] sm:$0x1] 0.0
          %587 = vst [vmem:[%s567] sm:$0x1] 0.0
          %588 = vst [vmem:[%s573] sm:$0x1] 0.0
        $region72: #{tpu_custom_call.1} parent=43 // pred_fallthru
          _
        // Predicated region
        $region73: #{tpu_custom_call.1} parent=43 // pred_check
          %p589 = pneg %p581
        $region74: #{tpu_custom_call.1} parent=43 // pred_check_branch
          %591 = sbr.rel (%p589) target = $region76
        $region75: #{tpu_custom_call.1} parent=43 // pred_region
          %v592 = vld [vmem:[%s458] sm:$0xff]
          %v593 = vld [vmem:[%s468] sm:$0x3]
          %595 = vst [vmem:[#allocation1] ss:$2 sm:$0xff] %v592
          %v596 = vld.sshfl [vmem:[#allocation1] sm:$0xff pattern:$0x75316420]
          %v597 = vld.sshfl [vmem:[#allocation1 + $0x8] sm:$0xff pattern:$0x75316420]
          %vm600 = vcmask 1043456
          %v601 = vsel %vm600, %v596, -inf
          %v602 = vrot.slane %v601, 4
          %v603 = vmax.f32 %v601, %v602
          %v604 = vrot.slane %v603, 2
          %v605 = vmax.f32 %v603, %v604
          %v606 = vrot.slane %v605, 1
          %v607 = vmax.f32 %v605, %v606
          %v608 = vsel %vm600, %v597, -inf
          %v609 = vrot.slane %v608, 4
          %v610 = vmax.f32 %v608, %v609
          %v611 = vrot.slane %v610, 2
          %v612 = vmax.f32 %v610, %v611
          %v613 = vrot.slane %v612, 1
          %v614 = vmax.f32 %v612, %v613
          %v617 = vrot.slane %v614, 4
          %v618 = vsel %vm600, %v607, %v617
          %v620 = vsub.f32 %v592, %v618
          %v621 = vmul.f32 %v620, 1.442695
          %v622 = vpow.pop %v621
          %624 = vst [vmem:[#allocation1] ss:$2 sm:$0xff] %v622
          %v625 = vld.sshfl [vmem:[#allocation1] sm:$0xff pattern:$0x75316420]
          %v626 = vld.sshfl [vmem:[#allocation1 + $0x8] sm:$0xff pattern:$0x75316420]
          %v629 = vsel %vm600, %v625, 0.0
          %v630 = vrot.slane %v629, 4
          %v631 = vadd.f32 %v629, %v630
          %v632 = vrot.slane %v631, 2
          %v633 = vadd.f32 %v631, %v632
          %v634 = vrot.slane %v633, 1
          %v635 = vadd.f32 %v633, %v634
          %v636 = vsel %vm600, %v626, 0.0
          %v637 = vrot.slane %v636, 4
          %v638 = vadd.f32 %v636, %v637
          %v639 = vrot.slane %v638, 2
          %v640 = vadd.f32 %v638, %v639
          %v641 = vrot.slane %v640, 1
          %v642 = vadd.f32 %v640, %v641
          %v643 = vlog2.pop %v635
          %v644 = vmul.f32 %v643, 0.6931472
          %v645 = vlog2.pop %v642
          %v646 = vmul.f32 %v645, 0.6931472
          %v647 = vadd.f32 %v607, %v644
          %v648 = vadd.f32 %v614, %v646
          %v649 = vlaneseq
          %v650 = vshrl.u32 %v649, 7
          %v651 = vperm.slane %v593, 0
          %v652 = vperm.slane %v593, 1
          %vm653 = vcmp.eq.s32.totalorder %v650, %v651
          %vm654 = vcmp.eq.s32.totalorder %v650, %v652
          %655 = vst [vmem:[#allocation1] ss:$2 sm:$0xff] %v592
          %v656 = vld.sshfl [vmem:[#allocation1] sm:$0xff pattern:$0x75316420]
          %v657 = vld.sshfl [vmem:[#allocation1 + $0x8] sm:$0xff pattern:$0x75316420]
          %v660 = vsel %vm653, %v656, 0.0
          %v661 = vsel %vm654, %v657, 0.0
          %v662 = vsel %vm600, %v660, 0.0
          %v663 = vrot.slane %v662, 4
          %v664 = vadd.f32 %v662, %v663
          %v665 = vrot.slane %v664, 2
          %v666 = vadd.f32 %v664, %v665
          %v667 = vrot.slane %v666, 1
          %v668 = vadd.f32 %v666, %v667
          %v669 = vsel %vm600, %v661, 0.0
          %v670 = vrot.slane %v669, 4
          %v671 = vadd.f32 %v669, %v670
          %v672 = vrot.slane %v671, 2
          %v673 = vadd.f32 %v671, %v672
          %v674 = vrot.slane %v673, 1
          %v675 = vadd.f32 %v673, %v674
          %vm676 = vcmp.ne.s32.totalorder %v593, 255
          %v677 = vsel %vm676, 1, 0
          %v678 = vcvt.s32.f32 %v677
          %v679 = vsub.f32 %v647, %v668
          %v680 = vsub.f32 %v648, %v675
          %v682 = vperm.slane %v678, 0
          %v683 = vperm.slane %v678, 1
          %v686 = vmul.f32 %v679, %v682
          %v687 = vmul.f32 %v680, %v683
          %v688 = vld [vmem:[%s561] sm:$0x1]
          %vm689 = vcmask 1040384
          %v690 = vsel %vm689, %v686, 0.0
          %v691 = vsel %vm689, %v687, 0.0
          %v692 = vadd.f32 %v690, %v691
          %693 = vadd.xlane.f32.xlu0 %v692
          %v694 = vpop.xlane.xlu0 %693
          %v695 = vrot.slane %v694, 4
          %v696 = vadd.f32 %v694, %v695
          %v697 = vrot.slane %v696, 2
          %v698 = vadd.f32 %v696, %v697
          %v699 = vrot.slane %v698, 1
          %v700 = vadd.f32 %v698, %v699
          %s701 = vtos %v700
          %v702 = vstv %s701
          %v703 = vadd.f32 %v688, %v702
          %704 = vst [vmem:[%s561] sm:$0x1] %v703
          %v705 = vld [vmem:[%s567] sm:$0x1]
          %v706 = vsel %vm689, %v682, 0.0
          %v707 = vsel %vm689, %v683, 0.0
          %v708 = vadd.f32 %v706, %v707
          %709 = vadd.xlane.f32.xlu0 %v708
          %v710 = vpop.xlane.xlu0 %709
          %v711 = vrot.slane %v710, 4
          %v712 = vadd.f32 %v710, %v711
          %v713 = vrot.slane %v712, 2
          %v714 = vadd.f32 %v712, %v713
          %v715 = vrot.slane %v714, 1
          %v716 = vadd.f32 %v714, %v715
          %s717 = vtos %v716
          %v718 = vstv %s717
          %v719 = vadd.f32 %v705, %v718
          %720 = vst [vmem:[%s567] sm:$0x1] %v719
          %vm721 = vcmp.ne.s32.totalorder %v593, 254
          %v722 = vsel %vm721, 1, 0
          %v723 = vcvt.s32.f32 %v722
          %v724 = vrcp.pop %v635
          %v725 = vrcp.pop %v642
          %v728 = vrot.slane %v725, 4
          %v729 = vsel %vm600, %v724, %v728
          %v731 = vmul.f32 %v622, %v729
          %v733 = vperm.slane %v723, 0
          %v734 = vperm.slane %v723, 1
          %v735 = vrot.slane %v734, 4
          %v736 = vsel %vm600, %v733, %v735
          %v738 = vmul.f32 %v731, %v736
          %739 = vst [vmem:[#allocation2] sm:$0xff] %v738
        $region76: #{tpu_custom_call.1} parent=43 // pred_fallthru
          _
        %v740 = vld [vmem:[%s488] sm:$0xff]
        %v741 = vld [vmem:[%s498] sm:$0x3]
        %743 = vst [vmem:[#allocation1] ss:$2 sm:$0xff] %v740
        %v744 = vld.sshfl [vmem:[#allocation1] sm:$0xff pattern:$0x75316420]
        %v745 = vld.sshfl [vmem:[#allocation1 + $0x8] sm:$0xff pattern:$0x75316420]
        %vm748 = vcmask 1043456
        %v749 = vsel %vm748, %v744, -inf
        %v750 = vrot.slane %v749, 4
        %v751 = vmax.f32 %v749, %v750
        %v752 = vrot.slane %v751, 2
        %v753 = vmax.f32 %v751, %v752
        %v754 = vrot.slane %v753, 1
        %v755 = vmax.f32 %v753, %v754
        %v756 = vsel %vm748, %v745, -inf
        %v757 = vrot.slane %v756, 4
        %v758 = vmax.f32 %v756, %v757
        %v759 = vrot.slane %v758, 2
        %v760 = vmax.f32 %v758, %v759
        %v761 = vrot.slane %v760, 1
        %v762 = vmax.f32 %v760, %v761
        %v765 = vrot.slane %v762, 4
        %v766 = vsel %vm748, %v755, %v765
        %v768 = vsub.f32 %v740, %v766
        %v769 = vmul.f32 %v768, 1.442695
        %v770 = vpow.pop %v769
        %772 = vst [vmem:[#allocation1] ss:$2 sm:$0xff] %v770
        %v773 = vld.sshfl [vmem:[#allocation1] sm:$0xff pattern:$0x75316420]
        %v774 = vld.sshfl [vmem:[#allocation1 + $0x8] sm:$0xff pattern:$0x75316420]
        %v777 = vsel %vm748, %v773, 0.0
        %v778 = vrot.slane %v777, 4
        %v779 = vadd.f32 %v777, %v778
        %v780 = vrot.slane %v779, 2
        %v781 = vadd.f32 %v779, %v780
        %v782 = vrot.slane %v781, 1
        %v783 = vadd.f32 %v781, %v782
        %v784 = vsel %vm748, %v774, 0.0
        %v785 = vrot.slane %v784, 4
        %v786 = vadd.f32 %v784, %v785
        %v787 = vrot.slane %v786, 2
        %v788 = vadd.f32 %v786, %v787
        %v789 = vrot.slane %v788, 1
        %v790 = vadd.f32 %v788, %v789
        %v791 = vrcp.pop %v783
        %v792 = vrcp.pop %v790
        %v795 = vrot.slane %v792, 4
        %v796 = vsel %vm748, %v791, %v795
        %v798 = vmul.f32 %v770, %v796
        %vm799 = vcmp.ne.s32.totalorder %v741, 254
        %v800 = vsel %vm799, 1, 0
        %v801 = vcvt.s32.f32 %v800
        %v803 = vperm.slane %v801, 0
        %v804 = vperm.slane %v801, 1
        %v805 = vrot.slane %v804, 4
        %v806 = vsel %vm748, %v803, %v805
        %v808 = vmul.f32 %v798, %v806
        %v809 = vld [vmem:[%s478] sm:$0xff]
        %v810 = vld [vmem:[%s478 + $0x8] sm:$0xff]
        %v811 = vld [vmem:[%s508] sm:$0xff]
        %v812 = vld [vmem:[%s508 + $0x8] sm:$0xff]
        %813 = vxpose.xlu0.b32.start [1/16] %v809, 128
        %814 = vxpose.xlu0.b32.cont [2/16] 0.0, 128
        %815 = vxpose.xlu0.b32.cont [3/16] 0.0, 128
        %816 = vxpose.xlu0.b32.cont [4/16] 0.0, 128
        %817 = vxpose.xlu0.b32.cont [5/16] 0.0, 128
        %818 = vxpose.xlu0.b32.cont [6/16] 0.0, 128
        %819 = vxpose.xlu0.b32.cont [7/16] 0.0, 128
        %820 = vxpose.xlu0.b32.cont [8/16] 0.0, 128
        %821 = vxpose.xlu0.b32.cont [9/16] 0.0, 128
        %822 = vxpose.xlu0.b32.cont [10/16] 0.0, 128
        %823 = vxpose.xlu0.b32.cont [11/16] 0.0, 128
        %824 = vxpose.xlu0.b32.cont [12/16] 0.0, 128
        %825 = vxpose.xlu0.b32.cont [13/16] 0.0, 128
        %826 = vxpose.xlu0.b32.cont [14/16] 0.0, 128
        %827 = vxpose.xlu0.b32.cont [15/16] 0.0, 128
        %828 = vxpose.xlu0.b32.end [16/16] 0.0, 128
        %v829 = vpop.trf.xlu0
        %v830 = vpop.trf.xlu0
        %v831 = vpop.trf.xlu0
        %v832 = vpop.trf.xlu0
        %v833 = vpop.trf.xlu0
        %v834 = vpop.trf.xlu0
        %v835 = vpop.trf.xlu0
        %v836 = vpop.trf.xlu0
        %v837 = vpop.trf.xlu0
        %v838 = vpop.trf.xlu0
        %v839 = vpop.trf.xlu0
        %v840 = vpop.trf.xlu0
        %v841 = vpop.trf.xlu0
        %v842 = vpop.trf.xlu0
        %v843 = vpop.trf.xlu0
        %v844 = vpop.trf.xlu0
        %845 = vxpose.xlu0.b32.start [1/16] %v810, 128
        %846 = vxpose.xlu0.b32.cont [2/16] 0.0, 128
        %847 = vxpose.xlu0.b32.cont [3/16] 0.0, 128
        %848 = vxpose.xlu0.b32.cont [4/16] 0.0, 128
        %849 = vxpose.xlu0.b32.cont [5/16] 0.0, 128
        %850 = vxpose.xlu0.b32.cont [6/16] 0.0, 128
        %851 = vxpose.xlu0.b32.cont [7/16] 0.0, 128
        %852 = vxpose.xlu0.b32.cont [8/16] 0.0, 128
        %853 = vxpose.xlu0.b32.cont [9/16] 0.0, 128
        %854 = vxpose.xlu0.b32.cont [10/16] 0.0, 128
        %855 = vxpose.xlu0.b32.cont [11/16] 0.0, 128
        %856 = vxpose.xlu0.b32.cont [12/16] 0.0, 128
        %857 = vxpose.xlu0.b32.cont [13/16] 0.0, 128
        %858 = vxpose.xlu0.b32.cont [14/16] 0.0, 128
        %859 = vxpose.xlu0.b32.cont [15/16] 0.0, 128
        %860 = vxpose.xlu0.b32.end [16/16] 0.0, 128
        %v861 = vpop.trf.xlu0
        %v862 = vpop.trf.xlu0
        %v863 = vpop.trf.xlu0
        %v864 = vpop.trf.xlu0
        %v865 = vpop.trf.xlu0
        %v866 = vpop.trf.xlu0
        %v867 = vpop.trf.xlu0
        %v868 = vpop.trf.xlu0
        %v869 = vpop.trf.xlu0
        %v870 = vpop.trf.xlu0
        %v871 = vpop.trf.xlu0
        %v872 = vpop.trf.xlu0
        %v873 = vpop.trf.xlu0
        %v874 = vpop.trf.xlu0
        %v875 = vpop.trf.xlu0
        %v876 = vpop.trf.xlu0
        %vm877 = vcmask 64512
        %v879 = vsel %vm877, %v829, 0
        %v882 = vsel %vm877, %v830, 0
        %v885 = vsel %vm877, %v831, 0
        %v888 = vsel %vm877, %v832, 0
        %v891 = vsel %vm877, %v833, 0
        %v894 = vsel %vm877, %v834, 0
        %v897 = vsel %vm877, %v835, 0
        %v900 = vsel %vm877, %v836, 0
        %v903 = vsel %vm877, %v837, 0
        %v906 = vsel %vm877, %v838, 0
        %v909 = vsel %vm877, %v839, 0
        %v912 = vsel %vm877, %v840, 0
        %v915 = vsel %vm877, %v841, 0
        %v918 = vsel %vm877, %v842, 0
        %v921 = vsel %vm877, %v843, 0
        %v924 = vsel %vm877, %v844, 0
        %v927 = vsel %vm877, %v861, 0
        %v930 = vsel %vm877, %v862, 0
        %v933 = vsel %vm877, %v863, 0
        %v936 = vsel %vm877, %v864, 0
        %v939 = vsel %vm877, %v865, 0
        %v942 = vsel %vm877, %v866, 0
        %v945 = vsel %vm877, %v867, 0
        %v948 = vsel %vm877, %v868, 0
        %v951 = vsel %vm877, %v869, 0
        %v954 = vsel %vm877, %v870, 0
        %v957 = vsel %vm877, %v871, 0
        %v960 = vsel %vm877, %v872, 0
        %v963 = vsel %vm877, %v873, 0
        %v966 = vsel %vm877, %v874, 0
        %v969 = vsel %vm877, %v875, 0
        %v972 = vsel %vm877, %v876, 0
        %974 = vmatpush.msra.mxu0 0.0
        %975 = vmatpush.msra.mxu0 0.0
        %976 = vmatpush.msra.mxu0 0.0
        %977 = vmatpush.msra.mxu0 0.0
        %978 = vmatpush.msra.mxu0 0.0
        %979 = vmatpush.msra.mxu0 0.0
        %980 = vmatpush.msra.mxu0 0.0
        %981 = vmatpush.msra.mxu0 0.0
        %982 = vmatpush.msra.mxu0 0.0
        %983 = vmatpush.msra.mxu0 0.0
        %984 = vmatpush.msra.mxu0 0.0
        %985 = vmatpush.msra.mxu0 0.0
        %986 = vmatpush.msra.mxu0 0.0
        %987 = vmatpush.msra.mxu0 0.0
        %988 = vmatpush.msra.mxu0 0.0
        %989 = vmatpush.msra.mxu0 %v811
        %990 = vmatmul.f32.gmra.mxu0 %v879
        %v991 = vpop.f32.mrf.mxu0
        %v992 = vadd.f32 0.0, %v991
        %993 = vmatmul.f32.gmra.mxu0 %v882
        %v994 = vpop.f32.mrf.mxu0
        %v995 = vadd.f32 0.0, %v994
        %996 = vmatmul.f32.gmra.mxu0 %v885
        %v997 = vpop.f32.mrf.mxu0
        %v998 = vadd.f32 0.0, %v997
        %999 = vmatmul.f32.gmra.mxu0 %v888
        %v1000 = vpop.f32.mrf.mxu0
        %v1001 = vadd.f32 0.0, %v1000
        %1002 = vmatmul.f32.gmra.mxu0 %v891
        %v1003 = vpop.f32.mrf.mxu0
        %v1004 = vadd.f32 0.0, %v1003
        %1005 = vmatmul.f32.gmra.mxu0 %v894
        %v1006 = vpop.f32.mrf.mxu0
        %v1007 = vadd.f32 0.0, %v1006
        %1008 = vmatmul.f32.gmra.mxu0 %v897
        %v1009 = vpop.f32.mrf.mxu0
        %v1010 = vadd.f32 0.0, %v1009
        %1011 = vmatmul.f32.gmra.mxu0 %v900
        %v1012 = vpop.f32.mrf.mxu0
        %v1013 = vadd.f32 0.0, %v1012
        %1014 = vmatmul.f32.gmra.mxu0 %v903
        %v1015 = vpop.f32.mrf.mxu0
        %v1016 = vadd.f32 0.0, %v1015
        %1017 = vmatmul.f32.gmra.mxu0 %v906
        %v1018 = vpop.f32.mrf.mxu0
        %v1019 = vadd.f32 0.0, %v1018
        %1020 = vmatmul.f32.gmra.mxu0 %v909
        %v1021 = vpop.f32.mrf.mxu0
        %v1022 = vadd.f32 0.0, %v1021
        %1023 = vmatmul.f32.gmra.mxu0 %v912
        %v1024 = vpop.f32.mrf.mxu0
        %v1025 = vadd.f32 0.0, %v1024
        %1026 = vmatmul.f32.gmra.mxu0 %v915
        %v1027 = vpop.f32.mrf.mxu0
        %v1028 = vadd.f32 0.0, %v1027
        %1029 = vmatmul.f32.gmra.mxu0 %v918
        %v1030 = vpop.f32.mrf.mxu0
        %v1031 = vadd.f32 0.0, %v1030
        %1032 = vmatmul.f32.gmra.mxu0 %v921
        %v1033 = vpop.f32.mrf.mxu0
        %v1034 = vadd.f32 0.0, %v1033
        %1035 = vmatmul.f32.gmra.mxu0 %v924
        %v1036 = vpop.f32.mrf.mxu0
        %v1037 = vadd.f32 0.0, %v1036
        %1038 = vmatmul.f32.gmra.mxu0 %v927
        %v1039 = vpop.f32.mrf.mxu0
        %v1040 = vadd.f32 0.0, %v1039
        %1041 = vmatmul.f32.gmra.mxu0 %v930
        %v1042 = vpop.f32.mrf.mxu0
        %v1043 = vadd.f32 0.0, %v1042
        %1044 = vmatmul.f32.gmra.mxu0 %v933
        %v1045 = vpop.f32.mrf.mxu0
        %v1046 = vadd.f32 0.0, %v1045
        %1047 = vmatmul.f32.gmra.mxu0 %v936
        %v1048 = vpop.f32.mrf.mxu0
        %v1049 = vadd.f32 0.0, %v1048
        %1050 = vmatmul.f32.gmra.mxu0 %v939
        %v1051 = vpop.f32.mrf.mxu0
        %v1052 = vadd.f32 0.0, %v1051
        %1053 = vmatmul.f32.gmra.mxu0 %v942
        %v1054 = vpop.f32.mrf.mxu0
        %v1055 = vadd.f32 0.0, %v1054
        %1056 = vmatmul.f32.gmra.mxu0 %v945
        %v1057 = vpop.f32.mrf.mxu0
        %v1058 = vadd.f32 0.0, %v1057
        %1059 = vmatmul.f32.gmra.mxu0 %v948
        %v1060 = vpop.f32.mrf.mxu0
        %v1061 = vadd.f32 0.0, %v1060
        %1062 = vmatmul.f32.gmra.mxu0 %v951
        %v1063 = vpop.f32.mrf.mxu0
        %v1064 = vadd.f32 0.0, %v1063
        %1065 = vmatmul.f32.gmra.mxu0 %v954
        %v1066 = vpop.f32.mrf.mxu0
        %v1067 = vadd.f32 0.0, %v1066
        %1068 = vmatmul.f32.gmra.mxu0 %v957
        %v1069 = vpop.f32.mrf.mxu0
        %v1070 = vadd.f32 0.0, %v1069
        %1071 = vmatmul.f32.gmra.mxu0 %v960
        %v1072 = vpop.f32.mrf.mxu0
        %v1073 = vadd.f32 0.0, %v1072
        %1074 = vmatmul.f32.gmra.mxu0 %v963
        %v1075 = vpop.f32.mrf.mxu0
        %v1076 = vadd.f32 0.0, %v1075
        %1077 = vmatmul.f32.gmra.mxu0 %v966
        %v1078 = vpop.f32.mrf.mxu0
        %v1079 = vadd.f32 0.0, %v1078
        %1080 = vmatmul.f32.gmra.mxu0 %v969
        %v1081 = vpop.f32.mrf.mxu0
        %v1082 = vadd.f32 0.0, %v1081
        %1083 = vmatmul.f32.gmra.mxu0 %v972
        %v1084 = vpop.f32.mrf.mxu0
        %v1085 = vadd.f32 0.0, %v1084
        %1086 = vdwg.mxu0
        %1087 = vmatpush.msra.mxu0 0.0
        %1088 = vmatpush.msra.mxu0 0.0
        %1089 = vmatpush.msra.mxu0 0.0
        %1090 = vmatpush.msra.mxu0 0.0
        %1091 = vmatpush.msra.mxu0 0.0
        %1092 = vmatpush.msra.mxu0 0.0
        %1093 = vmatpush.msra.mxu0 0.0
        %1094 = vmatpush.msra.mxu0 0.0
        %1095 = vmatpush.msra.mxu0 0.0
        %1096 = vmatpush.msra.mxu0 0.0
        %1097 = vmatpush.msra.mxu0 0.0
        %1098 = vmatpush.msra.mxu0 0.0
        %1099 = vmatpush.msra.mxu0 0.0
        %1100 = vmatpush.msra.mxu0 0.0
        %1101 = vmatpush.msra.mxu0 0.0
        %1102 = vmatpush.msra.mxu0 %v812
        %1103 = vmatmul.f32.gmra.mxu0 %v879
        %v1104 = vpop.f32.mrf.mxu0
        %v1105 = vadd.f32 0.0, %v1104
        %1106 = vmatmul.f32.gmra.mxu0 %v882
        %v1107 = vpop.f32.mrf.mxu0
        %v1108 = vadd.f32 0.0, %v1107
        %1109 = vmatmul.f32.gmra.mxu0 %v885
        %v1110 = vpop.f32.mrf.mxu0
        %v1111 = vadd.f32 0.0, %v1110
        %1112 = vmatmul.f32.gmra.mxu0 %v888
        %v1113 = vpop.f32.mrf.mxu0
        %v1114 = vadd.f32 0.0, %v1113
        %1115 = vmatmul.f32.gmra.mxu0 %v891
        %v1116 = vpop.f32.mrf.mxu0
        %v1117 = vadd.f32 0.0, %v1116
        %1118 = vmatmul.f32.gmra.mxu0 %v894
        %v1119 = vpop.f32.mrf.mxu0
        %v1120 = vadd.f32 0.0, %v1119
        %1121 = vmatmul.f32.gmra.mxu0 %v897
        %v1122 = vpop.f32.mrf.mxu0
        %v1123 = vadd.f32 0.0, %v1122
        %1124 = vmatmul.f32.gmra.mxu0 %v900
        %v1125 = vpop.f32.mrf.mxu0
        %v1126 = vadd.f32 0.0, %v1125
        %1127 = vmatmul.f32.gmra.mxu0 %v903
        %v1128 = vpop.f32.mrf.mxu0
        %v1129 = vadd.f32 0.0, %v1128
        %1130 = vmatmul.f32.gmra.mxu0 %v906
        %v1131 = vpop.f32.mrf.mxu0
        %v1132 = vadd.f32 0.0, %v1131
        %1133 = vmatmul.f32.gmra.mxu0 %v909
        %v1134 = vpop.f32.mrf.mxu0
        %v1135 = vadd.f32 0.0, %v1134
        %1136 = vmatmul.f32.gmra.mxu0 %v912
        %v1137 = vpop.f32.mrf.mxu0
        %v1138 = vadd.f32 0.0, %v1137
        %1139 = vmatmul.f32.gmra.mxu0 %v915
        %v1140 = vpop.f32.mrf.mxu0
        %v1141 = vadd.f32 0.0, %v1140
        %1142 = vmatmul.f32.gmra.mxu0 %v918
        %v1143 = vpop.f32.mrf.mxu0
        %v1144 = vadd.f32 0.0, %v1143
        %1145 = vmatmul.f32.gmra.mxu0 %v921
        %v1146 = vpop.f32.mrf.mxu0
        %v1147 = vadd.f32 0.0, %v1146
        %1148 = vmatmul.f32.gmra.mxu0 %v924
        %v1149 = vpop.f32.mrf.mxu0
        %v1150 = vadd.f32 0.0, %v1149
        %1151 = vmatmul.f32.gmra.mxu0 %v927
        %v1152 = vpop.f32.mrf.mxu0
        %v1153 = vadd.f32 0.0, %v1152
        %1154 = vmatmul.f32.gmra.mxu0 %v930
        %v1155 = vpop.f32.mrf.mxu0
        %v1156 = vadd.f32 0.0, %v1155
        %1157 = vmatmul.f32.gmra.mxu0 %v933
        %v1158 = vpop.f32.mrf.mxu0
        %v1159 = vadd.f32 0.0, %v1158
        %1160 = vmatmul.f32.gmra.mxu0 %v936
        %v1161 = vpop.f32.mrf.mxu0
        %v1162 = vadd.f32 0.0, %v1161
        %1163 = vmatmul.f32.gmra.mxu0 %v939
        %v1164 = vpop.f32.mrf.mxu0
        %v1165 = vadd.f32 0.0, %v1164
        %1166 = vmatmul.f32.gmra.mxu0 %v942
        %v1167 = vpop.f32.mrf.mxu0
        %v1168 = vadd.f32 0.0, %v1167
        %1169 = vmatmul.f32.gmra.mxu0 %v945
        %v1170 = vpop.f32.mrf.mxu0
        %v1171 = vadd.f32 0.0, %v1170
        %1172 = vmatmul.f32.gmra.mxu0 %v948
        %v1173 = vpop.f32.mrf.mxu0
        %v1174 = vadd.f32 0.0, %v1173
        %1175 = vmatmul.f32.gmra.mxu0 %v951
        %v1176 = vpop.f32.mrf.mxu0
        %v1177 = vadd.f32 0.0, %v1176
        %1178 = vmatmul.f32.gmra.mxu0 %v954
        %v1179 = vpop.f32.mrf.mxu0
        %v1180 = vadd.f32 0.0, %v1179
        %1181 = vmatmul.f32.gmra.mxu0 %v957
        %v1182 = vpop.f32.mrf.mxu0
        %v1183 = vadd.f32 0.0, %v1182
        %1184 = vmatmul.f32.gmra.mxu0 %v960
        %v1185 = vpop.f32.mrf.mxu0
        %v1186 = vadd.f32 0.0, %v1185
        %1187 = vmatmul.f32.gmra.mxu0 %v963
        %v1188 = vpop.f32.mrf.mxu0
        %v1189 = vadd.f32 0.0, %v1188
        %1190 = vmatmul.f32.gmra.mxu0 %v966
        %v1191 = vpop.f32.mrf.mxu0
        %v1192 = vadd.f32 0.0, %v1191
        %1193 = vmatmul.f32.gmra.mxu0 %v969
        %v1194 = vpop.f32.mrf.mxu0
        %v1195 = vadd.f32 0.0, %v1194
        %1196 = vmatmul.f32.gmra.mxu0 %v972
        %v1197 = vpop.f32.mrf.mxu0
        %v1198 = vadd.f32 0.0, %v1197
        %1199 = vdwg.mxu0
        %v1200 = vmul.f32 %v992, 1.442695
        %v1201 = vpow.pop %v1200
        %v1202 = vmul.f32 %v1105, 1.442695
        %v1203 = vpow.pop %v1202
        %v1204 = vmul.f32 %v995, 1.442695
        %v1205 = vpow.pop %v1204
        %v1206 = vmul.f32 %v1108, 1.442695
        %v1207 = vpow.pop %v1206
        %v1208 = vmul.f32 %v998, 1.442695
        %v1209 = vpow.pop %v1208
        %v1210 = vmul.f32 %v1111, 1.442695
        %v1211 = vpow.pop %v1210
        %v1212 = vmul.f32 %v1001, 1.442695
        %v1213 = vpow.pop %v1212
        %v1214 = vmul.f32 %v1114, 1.442695
        %v1215 = vpow.pop %v1214
        %v1216 = vmul.f32 %v1004, 1.442695
        %v1217 = vpow.pop %v1216
        %v1218 = vmul.f32 %v1117, 1.442695
        %v1219 = vpow.pop %v1218
        %v1220 = vmul.f32 %v1007, 1.442695
        %v1221 = vpow.pop %v1220
        %v1222 = vmul.f32 %v1120, 1.442695
        %v1223 = vpow.pop %v1222
        %v1224 = vmul.f32 %v1010, 1.442695
        %v1225 = vpow.pop %v1224
        %v1226 = vmul.f32 %v1123, 1.442695
        %v1227 = vpow.pop %v1226
        %v1228 = vmul.f32 %v1013, 1.442695
        %v1229 = vpow.pop %v1228
        %v1230 = vmul.f32 %v1126, 1.442695
        %v1231 = vpow.pop %v1230
        %v1232 = vmul.f32 %v1016, 1.442695
        %v1233 = vpow.pop %v1232
        %v1234 = vmul.f32 %v1129, 1.442695
        %v1235 = vpow.pop %v1234
        %v1236 = vmul.f32 %v1019, 1.442695
        %v1237 = vpow.pop %v1236
        %v1238 = vmul.f32 %v1132, 1.442695
        %v1239 = vpow.pop %v1238
        %v1240 = vmul.f32 %v1022, 1.442695
        %v1241 = vpow.pop %v1240
        %v1242 = vmul.f32 %v1135, 1.442695
        %v1243 = vpow.pop %v1242
        %v1244 = vmul.f32 %v1025, 1.442695
        %v1245 = vpow.pop %v1244
        %v1246 = vmul.f32 %v1138, 1.442695
        %v1247 = vpow.pop %v1246
        %v1248 = vmul.f32 %v1028, 1.442695
        %v1249 = vpow.pop %v1248
        %v1250 = vmul.f32 %v1141, 1.442695
        %v1251 = vpow.pop %v1250
        %v1252 = vmul.f32 %v1031, 1.442695
        %v1253 = vpow.pop %v1252
        %v1254 = vmul.f32 %v1144, 1.442695
        %v1255 = vpow.pop %v1254
        %v1256 = vmul.f32 %v1034, 1.442695
        %v1257 = vpow.pop %v1256
        %v1258 = vmul.f32 %v1147, 1.442695
        %v1259 = vpow.pop %v1258
        %v1260 = vmul.f32 %v1037, 1.442695
        %v1261 = vpow.pop %v1260
        %v1262 = vmul.f32 %v1150, 1.442695
        %v1263 = vpow.pop %v1262
        %v1264 = vmul.f32 %v1040, 1.442695
        %v1265 = vpow.pop %v1264
        %v1266 = vmul.f32 %v1153, 1.442695
        %v1267 = vpow.pop %v1266
        %v1268 = vmul.f32 %v1043, 1.442695
        %v1269 = vpow.pop %v1268
        %v1270 = vmul.f32 %v1156, 1.442695
        %v1271 = vpow.pop %v1270
        %v1272 = vmul.f32 %v1046, 1.442695
        %v1273 = vpow.pop %v1272
        %v1274 = vmul.f32 %v1159, 1.442695
        %v1275 = vpow.pop %v1274
        %v1276 = vmul.f32 %v1049, 1.442695
        %v1277 = vpow.pop %v1276
        %v1278 = vmul.f32 %v1162, 1.442695
        %v1279 = vpow.pop %v1278
        %v1280 = vmul.f32 %v1052, 1.442695
        %v1281 = vpow.pop %v1280
        %v1282 = vmul.f32 %v1165, 1.442695
        %v1283 = vpow.pop %v1282
        %v1284 = vmul.f32 %v1055, 1.442695
        %v1285 = vpow.pop %v1284
        %v1286 = vmul.f32 %v1168, 1.442695
        %v1287 = vpow.pop %v1286
        %v1288 = vmul.f32 %v1058, 1.442695
        %v1289 = vpow.pop %v1288
        %v1290 = vmul.f32 %v1171, 1.442695
        %v1291 = vpow.pop %v1290
        %v1292 = vmul.f32 %v1061, 1.442695
        %v1293 = vpow.pop %v1292
        %v1294 = vmul.f32 %v1174, 1.442695
        %v1295 = vpow.pop %v1294
        %v1296 = vmul.f32 %v1064, 1.442695
        %v1297 = vpow.pop %v1296
        %v1298 = vmul.f32 %v1177, 1.442695
        %v1299 = vpow.pop %v1298
        %v1300 = vmul.f32 %v1067, 1.442695
        %v1301 = vpow.pop %v1300
        %v1302 = vmul.f32 %v1180, 1.442695
        %v1303 = vpow.pop %v1302
        %v1304 = vmul.f32 %v1070, 1.442695
        %v1305 = vpow.pop %v1304
        %v1306 = vmul.f32 %v1183, 1.442695
        %v1307 = vpow.pop %v1306
        %v1308 = vmul.f32 %v1073, 1.442695
        %v1309 = vpow.pop %v1308
        %v1310 = vmul.f32 %v1186, 1.442695
        %v1311 = vpow.pop %v1310
        %v1312 = vmul.f32 %v1076, 1.442695
        %v1313 = vpow.pop %v1312
        %v1314 = vmul.f32 %v1189, 1.442695
        %v1315 = vpow.pop %v1314
        %v1316 = vmul.f32 %v1079, 1.442695
        %v1317 = vpow.pop %v1316
        %v1318 = vmul.f32 %v1192, 1.442695
        %v1319 = vpow.pop %v1318
        %v1320 = vmul.f32 %v1082, 1.442695
        %v1321 = vpow.pop %v1320
        %v1322 = vmul.f32 %v1195, 1.442695
        %v1323 = vpow.pop %v1322
        %v1324 = vmul.f32 %v1085, 1.442695
        %v1325 = vpow.pop %v1324
        %v1326 = vmul.f32 %v1198, 1.442695
        %v1327 = vpow.pop %v1326
        %v1328 = vld [vmem:[#allocation2] sm:$0xff]
        %1330 = vst [vmem:[#allocation1] ss:$2 sm:$0xff] %v1328
        %v1331 = vld.sshfl [vmem:[#allocation1] sm:$0xff pattern:$0x75316420]
        %v1332 = vld.sshfl [vmem:[#allocation1 + $0x8] sm:$0xff pattern:$0x75316420]
        %1335 = vxpose.xlu0.b32.start [1/16] %v1331, 128
        %1336 = vxpose.xlu0.b32.cont [2/16] 0.0, 128
        %1337 = vxpose.xlu0.b32.cont [3/16] 0.0, 128
        %1338 = vxpose.xlu0.b32.cont [4/16] 0.0, 128
        %1339 = vxpose.xlu0.b32.cont [5/16] 0.0, 128
        %1340 = vxpose.xlu0.b32.cont [6/16] 0.0, 128
        %1341 = vxpose.xlu0.b32.cont [7/16] 0.0, 128
        %1342 = vxpose.xlu0.b32.cont [8/16] 0.0, 128
        %1343 = vxpose.xlu0.b32.cont [9/16] 0.0, 128
        %1344 = vxpose.xlu0.b32.cont [10/16] 0.0, 128
        %1345 = vxpose.xlu0.b32.cont [11/16] 0.0, 128
        %1346 = vxpose.xlu0.b32.cont [12/16] 0.0, 128
        %1347 = vxpose.xlu0.b32.cont [13/16] 0.0, 128
        %1348 = vxpose.xlu0.b32.cont [14/16] 0.0, 128
        %1349 = vxpose.xlu0.b32.cont [15/16] 0.0, 128
        %1350 = vxpose.xlu0.b32.end [16/16] 0.0, 128
        %v1351 = vpop.trf.xlu0
        %v1352 = vpop.trf.xlu0
        %v1353 = vpop.trf.xlu0
        %v1354 = vpop.trf.xlu0
        %v1355 = vpop.trf.xlu0
        %v1356 = vpop.trf.xlu0
        %v1357 = vpop.trf.xlu0
        %v1358 = vpop.trf.xlu0
        %v1359 = vpop.trf.xlu0
        %v1360 = vpop.trf.xlu0
        %v1361 = vpop.trf.xlu0
        %v1362 = vpop.trf.xlu0
        %v1363 = vpop.trf.xlu0
        %v1364 = vpop.trf.xlu0
        %v1365 = vpop.trf.xlu0
        %v1366 = vpop.trf.xlu0
        %1367 = vxpose.xlu0.b32.start [1/16] %v1332, 128
        %1368 = vxpose.xlu0.b32.cont [2/16] 0.0, 128
        %1369 = vxpose.xlu0.b32.cont [3/16] 0.0, 128
        %1370 = vxpose.xlu0.b32.cont [4/16] 0.0, 128
        %1371 = vxpose.xlu0.b32.cont [5/16] 0.0, 128
        %1372 = vxpose.xlu0.b32.cont [6/16] 0.0, 128
        %1373 = vxpose.xlu0.b32.cont [7/16] 0.0, 128
        %1374 = vxpose.xlu0.b32.cont [8/16] 0.0, 128
        %1375 = vxpose.xlu0.b32.cont [9/16] 0.0, 128
        %1376 = vxpose.xlu0.b32.cont [10/16] 0.0, 128
        %1377 = vxpose.xlu0.b32.cont [11/16] 0.0, 128
        %1378 = vxpose.xlu0.b32.cont [12/16] 0.0, 128
        %1379 = vxpose.xlu0.b32.cont [13/16] 0.0, 128
        %1380 = vxpose.xlu0.b32.cont [14/16] 0.0, 128
        %1381 = vxpose.xlu0.b32.cont [15/16] 0.0, 128
        %1382 = vxpose.xlu0.b32.end [16/16] 0.0, 128
        %v1383 = vpop.trf.xlu0
        %v1384 = vpop.trf.xlu0
        %v1385 = vpop.trf.xlu0
        %v1386 = vpop.trf.xlu0
        %v1387 = vpop.trf.xlu0
        %v1388 = vpop.trf.xlu0
        %v1389 = vpop.trf.xlu0
        %v1390 = vpop.trf.xlu0
        %v1391 = vpop.trf.xlu0
        %v1392 = vpop.trf.xlu0
        %v1393 = vpop.trf.xlu0
        %v1394 = vpop.trf.xlu0
        %v1395 = vpop.trf.xlu0
        %v1396 = vpop.trf.xlu0
        %v1397 = vpop.trf.xlu0
        %v1398 = vpop.trf.xlu0
        %1400 = vst [vmem:[#allocation1] ss:$2 sm:$0xff] %v808
        %v1401 = vld.sshfl [vmem:[#allocation1] sm:$0xff pattern:$0x75316420]
        %v1402 = vld.sshfl [vmem:[#allocation1 + $0x8] sm:$0xff pattern:$0x75316420]
        %vm1403 = vcmask 31744
        %v1405 = vsel %vm1403, %v1351, 0
        %v1408 = vsel %vm1403, %v1352, 0
        %v1411 = vsel %vm1403, %v1353, 0
        %v1414 = vsel %vm1403, %v1354, 0
        %v1417 = vsel %vm1403, %v1355, 0
        %v1420 = vsel %vm1403, %v1356, 0
        %v1423 = vsel %vm1403, %v1357, 0
        %v1426 = vsel %vm1403, %v1358, 0
        %v1429 = vsel %vm1403, %v1359, 0
        %v1432 = vsel %vm1403, %v1360, 0
        %v1435 = vsel %vm1403, %v1361, 0
        %v1438 = vsel %vm1403, %v1362, 0
        %v1441 = vsel %vm1403, %v1363, 0
        %v1444 = vsel %vm1403, %v1364, 0
        %v1447 = vsel %vm1403, %v1365, 0
        %v1450 = vsel %vm1403, %v1366, 0
        %v1453 = vsel %vm1403, %v1383, 0
        %v1456 = vsel %vm1403, %v1384, 0
        %v1459 = vsel %vm1403, %v1385, 0
        %v1462 = vsel %vm1403, %v1386, 0
        %v1465 = vsel %vm1403, %v1387, 0
        %v1468 = vsel %vm1403, %v1388, 0
        %v1471 = vsel %vm1403, %v1389, 0
        %v1474 = vsel %vm1403, %v1390, 0
        %v1477 = vsel %vm1403, %v1391, 0
        %v1480 = vsel %vm1403, %v1392, 0
        %v1483 = vsel %vm1403, %v1393, 0
        %v1486 = vsel %vm1403, %v1394, 0
        %v1489 = vsel %vm1403, %v1395, 0
        %v1492 = vsel %vm1403, %v1396, 0
        %v1495 = vsel %vm1403, %v1397, 0
        %v1498 = vsel %vm1403, %v1398, 0
        %v1500 = vsel %vm748, %v1401, 0
        %v1502 = vsel %vm748, %v1402, 0
        %1504 = vmatpush.msra.mxu0 0.0
        %1505 = vmatpush.msra.mxu0 0.0
        %1506 = vmatpush.msra.mxu0 0.0
        %1507 = vmatpush.msra.mxu0 0.0
        %1508 = vmatpush.msra.mxu0 0.0
        %1509 = vmatpush.msra.mxu0 0.0
        %1510 = vmatpush.msra.mxu0 0.0
        %1511 = vmatpush.msra.mxu0 0.0
        %1512 = vmatpush.msra.mxu0 0.0
        %1513 = vmatpush.msra.mxu0 0.0
        %1514 = vmatpush.msra.mxu0 0.0
        %1515 = vmatpush.msra.mxu0 0.0
        %1516 = vmatpush.msra.mxu0 0.0
        %1517 = vmatpush.msra.mxu0 0.0
        %1518 = vmatpush.msra.mxu0 0.0
        %1519 = vmatpush.msra.mxu0 %v1500
        %1520 = vmatmul.f32.gmra.mxu0 %v1405
        %v1521 = vpop.f32.mrf.mxu0
        %v1522 = vadd.f32 0.0, %v1521
        %1523 = vmatmul.f32.gmra.mxu0 %v1408
        %v1524 = vpop.f32.mrf.mxu0
        %v1525 = vadd.f32 0.0, %v1524
        %1526 = vmatmul.f32.gmra.mxu0 %v1411
        %v1527 = vpop.f32.mrf.mxu0
        %v1528 = vadd.f32 0.0, %v1527
        %1529 = vmatmul.f32.gmra.mxu0 %v1414
        %v1530 = vpop.f32.mrf.mxu0
        %v1531 = vadd.f32 0.0, %v1530
        %1532 = vmatmul.f32.gmra.mxu0 %v1417
        %v1533 = vpop.f32.mrf.mxu0
        %v1534 = vadd.f32 0.0, %v1533
        %1535 = vmatmul.f32.gmra.mxu0 %v1420
        %v1536 = vpop.f32.mrf.mxu0
        %v1537 = vadd.f32 0.0, %v1536
        %1538 = vmatmul.f32.gmra.mxu0 %v1423
        %v1539 = vpop.f32.mrf.mxu0
        %v1540 = vadd.f32 0.0, %v1539
        %1541 = vmatmul.f32.gmra.mxu0 %v1426
        %v1542 = vpop.f32.mrf.mxu0
        %v1543 = vadd.f32 0.0, %v1542
        %1544 = vmatmul.f32.gmra.mxu0 %v1429
        %v1545 = vpop.f32.mrf.mxu0
        %v1546 = vadd.f32 0.0, %v1545
        %1547 = vmatmul.f32.gmra.mxu0 %v1432
        %v1548 = vpop.f32.mrf.mxu0
        %v1549 = vadd.f32 0.0, %v1548
        %1550 = vmatmul.f32.gmra.mxu0 %v1435
        %v1551 = vpop.f32.mrf.mxu0
        %v1552 = vadd.f32 0.0, %v1551
        %1553 = vmatmul.f32.gmra.mxu0 %v1438
        %v1554 = vpop.f32.mrf.mxu0
        %v1555 = vadd.f32 0.0, %v1554
        %1556 = vmatmul.f32.gmra.mxu0 %v1441
        %v1557 = vpop.f32.mrf.mxu0
        %v1558 = vadd.f32 0.0, %v1557
        %1559 = vmatmul.f32.gmra.mxu0 %v1444
        %v1560 = vpop.f32.mrf.mxu0
        %v1561 = vadd.f32 0.0, %v1560
        %1562 = vmatmul.f32.gmra.mxu0 %v1447
        %v1563 = vpop.f32.mrf.mxu0
        %v1564 = vadd.f32 0.0, %v1563
        %1565 = vmatmul.f32.gmra.mxu0 %v1450
        %v1566 = vpop.f32.mrf.mxu0
        %v1567 = vadd.f32 0.0, %v1566
        %1568 = vmatmul.f32.gmra.mxu0 %v1453
        %v1569 = vpop.f32.mrf.mxu0
        %v1570 = vadd.f32 0.0, %v1569
        %1571 = vmatmul.f32.gmra.mxu0 %v1456
        %v1572 = vpop.f32.mrf.mxu0
        %v1573 = vadd.f32 0.0, %v1572
        %1574 = vmatmul.f32.gmra.mxu0 %v1459
        %v1575 = vpop.f32.mrf.mxu0
        %v1576 = vadd.f32 0.0, %v1575
        %1577 = vmatmul.f32.gmra.mxu0 %v1462
        %v1578 = vpop.f32.mrf.mxu0
        %v1579 = vadd.f32 0.0, %v1578
        %1580 = vmatmul.f32.gmra.mxu0 %v1465
        %v1581 = vpop.f32.mrf.mxu0
        %v1582 = vadd.f32 0.0, %v1581
        %1583 = vmatmul.f32.gmra.mxu0 %v1468
        %v1584 = vpop.f32.mrf.mxu0
        %v1585 = vadd.f32 0.0, %v1584
        %1586 = vmatmul.f32.gmra.mxu0 %v1471
        %v1587 = vpop.f32.mrf.mxu0
        %v1588 = vadd.f32 0.0, %v1587
        %1589 = vmatmul.f32.gmra.mxu0 %v1474
        %v1590 = vpop.f32.mrf.mxu0
        %v1591 = vadd.f32 0.0, %v1590
        %1592 = vmatmul.f32.gmra.mxu0 %v1477
        %v1593 = vpop.f32.mrf.mxu0
        %v1594 = vadd.f32 0.0, %v1593
        %1595 = vmatmul.f32.gmra.mxu0 %v1480
        %v1596 = vpop.f32.mrf.mxu0
        %v1597 = vadd.f32 0.0, %v1596
        %1598 = vmatmul.f32.gmra.mxu0 %v1483
        %v1599 = vpop.f32.mrf.mxu0
        %v1600 = vadd.f32 0.0, %v1599
        %1601 = vmatmul.f32.gmra.mxu0 %v1486
        %v1602 = vpop.f32.mrf.mxu0
        %v1603 = vadd.f32 0.0, %v1602
        %1604 = vmatmul.f32.gmra.mxu0 %v1489
        %v1605 = vpop.f32.mrf.mxu0
        %v1606 = vadd.f32 0.0, %v1605
        %1607 = vmatmul.f32.gmra.mxu0 %v1492
        %v1608 = vpop.f32.mrf.mxu0
        %v1609 = vadd.f32 0.0, %v1608
        %1610 = vmatmul.f32.gmra.mxu0 %v1495
        %v1611 = vpop.f32.mrf.mxu0
        %v1612 = vadd.f32 0.0, %v1611
        %1613 = vmatmul.f32.gmra.mxu0 %v1498
        %v1614 = vpop.f32.mrf.mxu0
        %v1615 = vadd.f32 0.0, %v1614
        %1616 = vdwg.mxu0
        %1617 = vmatpush.msra.mxu0 0.0
        %1618 = vmatpush.msra.mxu0 0.0
        %1619 = vmatpush.msra.mxu0 0.0
        %1620 = vmatpush.msra.mxu0 0.0
        %1621 = vmatpush.msra.mxu0 0.0
        %1622 = vmatpush.msra.mxu0 0.0
        %1623 = vmatpush.msra.mxu0 0.0
        %1624 = vmatpush.msra.mxu0 0.0
        %1625 = vmatpush.msra.mxu0 0.0
        %1626 = vmatpush.msra.mxu0 0.0
        %1627 = vmatpush.msra.mxu0 0.0
        %1628 = vmatpush.msra.mxu0 0.0
        %1629 = vmatpush.msra.mxu0 0.0
        %1630 = vmatpush.msra.mxu0 0.0
        %1631 = vmatpush.msra.mxu0 0.0
        %1632 = vmatpush.msra.mxu0 %v1502
        %1633 = vmatmul.f32.gmra.mxu0 %v1405
        %v1634 = vpop.f32.mrf.mxu0
        %v1635 = vadd.f32 0.0, %v1634
        %1636 = vmatmul.f32.gmra.mxu0 %v1408
        %v1637 = vpop.f32.mrf.mxu0
        %v1638 = vadd.f32 0.0, %v1637
        %1639 = vmatmul.f32.gmra.mxu0 %v1411
        %v1640 = vpop.f32.mrf.mxu0
        %v1641 = vadd.f32 0.0, %v1640
        %1642 = vmatmul.f32.gmra.mxu0 %v1414
        %v1643 = vpop.f32.mrf.mxu0
        %v1644 = vadd.f32 0.0, %v1643
        %1645 = vmatmul.f32.gmra.mxu0 %v1417
        %v1646 = vpop.f32.mrf.mxu0
        %v1647 = vadd.f32 0.0, %v1646
        %1648 = vmatmul.f32.gmra.mxu0 %v1420
        %v1649 = vpop.f32.mrf.mxu0
        %v1650 = vadd.f32 0.0, %v1649
        %1651 = vmatmul.f32.gmra.mxu0 %v1423
        %v1652 = vpop.f32.mrf.mxu0
        %v1653 = vadd.f32 0.0, %v1652
        %1654 = vmatmul.f32.gmra.mxu0 %v1426
        %v1655 = vpop.f32.mrf.mxu0
        %v1656 = vadd.f32 0.0, %v1655
        %1657 = vmatmul.f32.gmra.mxu0 %v1429
        %v1658 = vpop.f32.mrf.mxu0
        %v1659 = vadd.f32 0.0, %v1658
        %1660 = vmatmul.f32.gmra.mxu0 %v1432
        %v1661 = vpop.f32.mrf.mxu0
        %v1662 = vadd.f32 0.0, %v1661
        %1663 = vmatmul.f32.gmra.mxu0 %v1435
        %v1664 = vpop.f32.mrf.mxu0
        %v1665 = vadd.f32 0.0, %v1664
        %1666 = vmatmul.f32.gmra.mxu0 %v1438
        %v1667 = vpop.f32.mrf.mxu0
        %v1668 = vadd.f32 0.0, %v1667
        %1669 = vmatmul.f32.gmra.mxu0 %v1441
        %v1670 = vpop.f32.mrf.mxu0
        %v1671 = vadd.f32 0.0, %v1670
        %1672 = vmatmul.f32.gmra.mxu0 %v1444
        %v1673 = vpop.f32.mrf.mxu0
        %v1674 = vadd.f32 0.0, %v1673
        %1675 = vmatmul.f32.gmra.mxu0 %v1447
        %v1676 = vpop.f32.mrf.mxu0
        %v1677 = vadd.f32 0.0, %v1676
        %1678 = vmatmul.f32.gmra.mxu0 %v1450
        %v1679 = vpop.f32.mrf.mxu0
        %v1680 = vadd.f32 0.0, %v1679
        %1681 = vmatmul.f32.gmra.mxu0 %v1453
        %v1682 = vpop.f32.mrf.mxu0
        %v1683 = vadd.f32 0.0, %v1682
        %1684 = vmatmul.f32.gmra.mxu0 %v1456
        %v1685 = vpop.f32.mrf.mxu0
        %v1686 = vadd.f32 0.0, %v1685
        %1687 = vmatmul.f32.gmra.mxu0 %v1459
        %v1688 = vpop.f32.mrf.mxu0
        %v1689 = vadd.f32 0.0, %v1688
        %1690 = vmatmul.f32.gmra.mxu0 %v1462
        %v1691 = vpop.f32.mrf.mxu0
        %v1692 = vadd.f32 0.0, %v1691
        %1693 = vmatmul.f32.gmra.mxu0 %v1465
        %v1694 = vpop.f32.mrf.mxu0
        %v1695 = vadd.f32 0.0, %v1694
        %1696 = vmatmul.f32.gmra.mxu0 %v1468
        %v1697 = vpop.f32.mrf.mxu0
        %v1698 = vadd.f32 0.0, %v1697
        %1699 = vmatmul.f32.gmra.mxu0 %v1471
        %v1700 = vpop.f32.mrf.mxu0
        %v1701 = vadd.f32 0.0, %v1700
        %1702 = vmatmul.f32.gmra.mxu0 %v1474
        %v1703 = vpop.f32.mrf.mxu0
        %v1704 = vadd.f32 0.0, %v1703
        %1705 = vmatmul.f32.gmra.mxu0 %v1477
        %v1706 = vpop.f32.mrf.mxu0
        %v1707 = vadd.f32 0.0, %v1706
        %1708 = vmatmul.f32.gmra.mxu0 %v1480
        %v1709 = vpop.f32.mrf.mxu0
        %v1710 = vadd.f32 0.0, %v1709
        %1711 = vmatmul.f32.gmra.mxu0 %v1483
        %v1712 = vpop.f32.mrf.mxu0
        %v1713 = vadd.f32 0.0, %v1712
        %1714 = vmatmul.f32.gmra.mxu0 %v1486
        %v1715 = vpop.f32.mrf.mxu0
        %v1716 = vadd.f32 0.0, %v1715
        %1717 = vmatmul.f32.gmra.mxu0 %v1489
        %v1718 = vpop.f32.mrf.mxu0
        %v1719 = vadd.f32 0.0, %v1718
        %1720 = vmatmul.f32.gmra.mxu0 %v1492
        %v1721 = vpop.f32.mrf.mxu0
        %v1722 = vadd.f32 0.0, %v1721
        %1723 = vmatmul.f32.gmra.mxu0 %v1495
        %v1724 = vpop.f32.mrf.mxu0
        %v1725 = vadd.f32 0.0, %v1724
        %1726 = vmatmul.f32.gmra.mxu0 %v1498
        %v1727 = vpop.f32.mrf.mxu0
        %v1728 = vadd.f32 0.0, %v1727
        %1729 = vdwg.mxu0
        %v1730 = vld [vmem:[%s573] sm:$0x1]
        %v1731 = vmul.f32 %v1201, %v1522
        %v1732 = vmul.f32 %v1203, %v1635
        %v1733 = vmul.f32 %v1205, %v1525
        %v1734 = vmul.f32 %v1207, %v1638
        %v1735 = vmul.f32 %v1209, %v1528
        %v1736 = vmul.f32 %v1211, %v1641
        %v1737 = vmul.f32 %v1213, %v1531
        %v1738 = vmul.f32 %v1215, %v1644
        %v1739 = vmul.f32 %v1217, %v1534
        %v1740 = vmul.f32 %v1219, %v1647
        %v1741 = vmul.f32 %v1221, %v1537
        %v1742 = vmul.f32 %v1223, %v1650
        %v1743 = vmul.f32 %v1225, %v1540
        %v1744 = vmul.f32 %v1227, %v1653
        %v1745 = vmul.f32 %v1229, %v1543
        %v1746 = vmul.f32 %v1231, %v1656
        %v1747 = vmul.f32 %v1233, %v1546
        %v1748 = vmul.f32 %v1235, %v1659
        %v1749 = vmul.f32 %v1237, %v1549
        %v1750 = vmul.f32 %v1239, %v1662
        %v1751 = vmul.f32 %v1241, %v1552
        %v1752 = vmul.f32 %v1243, %v1665
        %v1753 = vmul.f32 %v1245, %v1555
        %v1754 = vmul.f32 %v1247, %v1668
        %v1755 = vmul.f32 %v1249, %v1558
        %v1756 = vmul.f32 %v1251, %v1671
        %v1757 = vmul.f32 %v1253, %v1561
        %v1758 = vmul.f32 %v1255, %v1674
        %v1759 = vmul.f32 %v1257, %v1564
        %v1760 = vmul.f32 %v1259, %v1677
        %v1761 = vmul.f32 %v1261, %v1567
        %v1762 = vmul.f32 %v1263, %v1680
        %v1763 = vmul.f32 %v1265, %v1570
        %v1764 = vmul.f32 %v1267, %v1683
        %v1765 = vmul.f32 %v1269, %v1573
        %v1766 = vmul.f32 %v1271, %v1686
        %v1767 = vmul.f32 %v1273, %v1576
        %v1768 = vmul.f32 %v1275, %v1689
        %v1769 = vmul.f32 %v1277, %v1579
        %v1770 = vmul.f32 %v1279, %v1692
        %v1771 = vmul.f32 %v1281, %v1582
        %v1772 = vmul.f32 %v1283, %v1695
        %v1773 = vmul.f32 %v1285, %v1585
        %v1774 = vmul.f32 %v1287, %v1698
        %v1775 = vmul.f32 %v1289, %v1588
        %v1776 = vmul.f32 %v1291, %v1701
        %v1777 = vmul.f32 %v1293, %v1591
        %v1778 = vmul.f32 %v1295, %v1704
        %v1779 = vmul.f32 %v1297, %v1594
        %v1780 = vmul.f32 %v1299, %v1707
        %v1781 = vmul.f32 %v1301, %v1597
        %v1782 = vmul.f32 %v1303, %v1710
        %v1783 = vmul.f32 %v1305, %v1600
        %v1784 = vmul.f32 %v1307, %v1713
        %v1785 = vmul.f32 %v1309, %v1603
        %v1786 = vmul.f32 %v1311, %v1716
        %v1787 = vmul.f32 %v1313, %v1606
        %v1788 = vmul.f32 %v1315, %v1719
        %v1789 = vmul.f32 %v1317, %v1609
        %v1790 = vmul.f32 %v1319, %v1722
        %v1791 = vmul.f32 %v1321, %v1612
        %v1792 = vmul.f32 %v1323, %v1725
        %v1793 = vmul.f32 %v1325, %v1615
        %v1794 = vmul.f32 %v1327, %v1728
        %v1795 = vadd.f32 %v1731, %v1732
        %v1796 = vadd.f32 %v1795, %v1733
        %v1797 = vadd.f32 %v1796, %v1734
        %v1798 = vadd.f32 %v1797, %v1735
        %v1799 = vadd.f32 %v1798, %v1736
        %v1800 = vadd.f32 %v1799, %v1737
        %v1801 = vadd.f32 %v1800, %v1738
        %v1802 = vadd.f32 %v1801, %v1739
        %v1803 = vadd.f32 %v1802, %v1740
        %v1804 = vadd.f32 %v1803, %v1741
        %v1805 = vadd.f32 %v1804, %v1742
        %v1806 = vadd.f32 %v1805, %v1743
        %v1807 = vadd.f32 %v1806, %v1744
        %v1808 = vadd.f32 %v1807, %v1745
        %v1809 = vadd.f32 %v1808, %v1746
        %v1810 = vadd.f32 %v1809, %v1747
        %v1811 = vadd.f32 %v1810, %v1748
        %v1812 = vadd.f32 %v1811, %v1749
        %v1813 = vadd.f32 %v1812, %v1750
        %v1814 = vadd.f32 %v1813, %v1751
        %v1815 = vadd.f32 %v1814, %v1752
        %v1816 = vadd.f32 %v1815, %v1753
        %v1817 = vadd.f32 %v1816, %v1754
        %v1818 = vadd.f32 %v1817, %v1755
        %v1819 = vadd.f32 %v1818, %v1756
        %v1820 = vadd.f32 %v1819, %v1757
        %v1821 = vadd.f32 %v1820, %v1758
        %v1822 = vadd.f32 %v1821, %v1759
        %v1823 = vadd.f32 %v1822, %v1760
        %v1824 = vadd.f32 %v1823, %v1761
        %v1825 = vadd.f32 %v1824, %v1762
        %v1826 = vadd.f32 %v1825, %v1763
        %v1827 = vadd.f32 %v1826, %v1764
        %v1828 = vadd.f32 %v1827, %v1765
        %v1829 = vadd.f32 %v1828, %v1766
        %v1830 = vadd.f32 %v1829, %v1767
        %v1831 = vadd.f32 %v1830, %v1768
        %v1832 = vadd.f32 %v1831, %v1769
        %v1833 = vadd.f32 %v1832, %v1770
        %v1834 = vadd.f32 %v1833, %v1771
        %v1835 = vadd.f32 %v1834, %v1772
        %v1836 = vadd.f32 %v1835, %v1773
        %v1837 = vadd.f32 %v1836, %v1774
        %v1838 = vadd.f32 %v1837, %v1775
        %v1839 = vadd.f32 %v1838, %v1776
        %v1840 = vadd.f32 %v1839, %v1777
        %v1841 = vadd.f32 %v1840, %v1778
        %v1842 = vadd.f32 %v1841, %v1779
        %v1843 = vadd.f32 %v1842, %v1780
        %v1844 = vadd.f32 %v1843, %v1781
        %v1845 = vadd.f32 %v1844, %v1782
        %v1846 = vadd.f32 %v1845, %v1783
        %v1847 = vadd.f32 %v1846, %v1784
        %v1848 = vadd.f32 %v1847, %v1785
        %v1849 = vadd.f32 %v1848, %v1786
        %v1850 = vadd.f32 %v1849, %v1787
        %v1851 = vadd.f32 %v1850, %v1788
        %v1852 = vadd.f32 %v1851, %v1789
        %v1853 = vadd.f32 %v1852, %v1790
        %v1854 = vadd.f32 %v1853, %v1791
        %v1855 = vadd.f32 %v1854, %v1792
        %v1856 = vadd.f32 %v1855, %v1793
        %v1857 = vadd.f32 %v1856, %v1794
        %1858 = vadd.xlane.f32.xlu0 %v1857
        %v1859 = vpop.xlane.xlu0 %1858
        %v1860 = vrot.slane %v1859, 4
        %v1861 = vadd.f32 %v1859, %v1860
        %v1862 = vrot.slane %v1861, 2
        %v1863 = vadd.f32 %v1861, %v1862
        %v1864 = vrot.slane %v1863, 1
        %v1865 = vadd.f32 %v1863, %v1864
        %s1866 = vtos %v1865
        %v1867 = vstv %s1866
        %v1868 = vadd.f32 %v1730, %v1867
        %1869 = vst [vmem:[%s573] sm:$0x1] %v1868
        %s1870 = sand.u32 %s233, 1
        %s1871 = scalar_lea.sflag [#allocation5], %s1870
        %s1872 = sand.u32 %s233, 1
        %s1873 = scalar_lea.vmem [#allocation14], %s1872
        %s1874 = sand.u32 %s38, 1
        %s1875 = scalar_lea.sflag [#allocation16], %s1874
        %s1876 = sand.u32 %s259, 1
        %s1877 = scalar_lea.vmem [#allocation15], %s1876
        %s1878 = sand.u32 %s38, 1
        %s1879 = scalar_lea.sflag [#allocation16], %s1878
        %s1880 = sand.u32 %s285, 1
        %s1881 = scalar_lea.vmem [#allocation17], %s1880
        // Predicated region
        $region77: #{tpu_custom_call.1} parent=43 // pred_check
          %p1882 = pneg %p243
        $region78: #{tpu_custom_call.1} parent=43 // pred_check_branch
          %1884 = sbr.rel (%p1882) target = $region80
        $region79: #{tpu_custom_call.1} parent=43 // pred_region
          %1886 = vsyncadd %s1871, 0
          %s1887 = scalar_lea.hbm %s6, %s43
          %s1889 = sshll.u32 %s1873, 4
          %s1890 = int_to_ptr.vmem [resolvable:$true] %s1889
          %s1891 = sshll.u32 %s1887, 4
          %s1892 = int_to_ptr.hbm [resolvable:$true] %s1891
          %1894 = dma.vmem_to_hbm [thread:$0]  %s1890, 16, %s1892, %s1871
        $region80: #{tpu_custom_call.1} parent=43 // pred_fallthru
          _
        // Predicated region
        $region81: #{tpu_custom_call.1} parent=43 // pred_check
          %p1895 = pneg %p269
        $region82: #{tpu_custom_call.1} parent=43 // pred_check_branch
          %1897 = sbr.rel (%p1895) target = $region84
        $region83: #{tpu_custom_call.1} parent=43 // pred_region
          %1899 = vsyncadd %s1875, 0
          %s1900 = scalar_lea.hbm %s7, %s43
          %s1902 = sshll.u32 %s1877, 4
          %s1903 = int_to_ptr.vmem [resolvable:$true] %s1902
          %s1904 = sshll.u32 %s1900, 4
          %s1905 = int_to_ptr.hbm [resolvable:$true] %s1904
          %1907 = dma.vmem_to_hbm [thread:$0]  %s1903, 16, %s1905, %s1875
        $region84: #{tpu_custom_call.1} parent=43 // pred_fallthru
          _
        // Predicated region
        $region85: #{tpu_custom_call.1} parent=43 // pred_check
          %p1908 = pneg %p295
        $region86: #{tpu_custom_call.1} parent=43 // pred_check_branch
          %1910 = sbr.rel (%p1908) target = $region88
        $region87: #{tpu_custom_call.1} parent=43 // pred_region
          %1912 = vsyncadd %s1879, 0
          %s1913 = scalar_lea.hbm %s8, %s43
          %s1915 = sshll.u32 %s1881, 4
          %s1916 = int_to_ptr.vmem [resolvable:$true] %s1915
          %s1917 = sshll.u32 %s1913, 4
          %s1918 = int_to_ptr.hbm [resolvable:$true] %s1917
          %1920 = dma.vmem_to_hbm [thread:$0]  %s1916, 16, %s1918, %s1879
        $region88: #{tpu_custom_call.1} parent=43 // pred_fallthru
          _
      $region44: #{tpu_custom_call.1} parent=5 // pred_fallthru
        _
      %p1921 = scmp.le.s32.totalorder 2, %s33
      // Predicated region
      $region89: #{tpu_custom_call.1} parent=5 // pred_check
        %p1922 = pneg %p1921
      $region90: #{tpu_custom_call.1} parent=5 // pred_check_branch
        %1924 = sbr.rel (%p1922) target = $region92
      $region91: #{tpu_custom_call.1} parent=5 // pred_region
        %s1925 = ssub.s32 %s33, 2
        // Predicated region
        $region93: #{tpu_custom_call.1} parent=91 // pred_check
          %p1926 = pneg %p249
        $region94: #{tpu_custom_call.1} parent=91 // pred_check_branch
          %1928 = sbr.rel (%p1926) target = $region96
        $region95: #{tpu_custom_call.1} parent=91 // pred_region
          %s1929 = sand.u32 %s234, 1
          %s1930 = scalar_lea.sflag [#allocation5], %s1929
          %s1931 = sand.u32 %s234, 1
          %s1932 = scalar_lea.vmem [#allocation14], %s1931
          %1934 = dma.done %s1930, 16
        $region96: #{tpu_custom_call.1} parent=91 // pred_fallthru
          _
        // Predicated region
        $region97: #{tpu_custom_call.1} parent=91 // pred_check
          %p1935 = pneg %p275
        $region98: #{tpu_custom_call.1} parent=91 // pred_check_branch
          %1937 = sbr.rel (%p1935) target = $region100
        $region99: #{tpu_custom_call.1} parent=91 // pred_region
          %s1938 = sand.u32 %s39, 1
          %s1939 = scalar_lea.sflag [#allocation16], %s1938
          %s1940 = sand.u32 %s260, 1
          %s1941 = scalar_lea.vmem [#allocation15], %s1940
          %1943 = dma.done %s1939, 16
        $region100: #{tpu_custom_call.1} parent=91 // pred_fallthru
          _
        // Predicated region
        $region101: #{tpu_custom_call.1} parent=91 // pred_check
          %p1944 = pneg %p301
        $region102: #{tpu_custom_call.1} parent=91 // pred_check_branch
          %1946 = sbr.rel (%p1944) target = $region104
        $region103: #{tpu_custom_call.1} parent=91 // pred_region
          %s1947 = sand.u32 %s39, 1
          %s1948 = scalar_lea.sflag [#allocation16], %s1947
          %s1949 = sand.u32 %s286, 1
          %s1950 = scalar_lea.vmem [#allocation17], %s1949
          %1952 = dma.done %s1948, 16
        $region104: #{tpu_custom_call.1} parent=91 // pred_fallthru
          _
      $region92: #{tpu_custom_call.1} parent=5 // pred_fallthru
        _
    $region6: #{tpu_custom_call.1} parent=1 // loop_footer
      %s37 = sadd.s32 1, %s33
    $region7: #{tpu_custom_call.1} parent=1 // loop_footer_branch
      %32 = sbr.rel target = $region3
    $region8: #{tpu_custom_call.1} parent=1 // loop_exit
      _
    %1953 = vsyncpa [#allocation4], 1
    %s1954 = scalar_lea.sflag [#allocation4], 1
    %1955 = vsyncpa %s1954, 1
    %1956 = vsyncpa [#allocation7], 1
    %s1957 = scalar_lea.sflag [#allocation7], 1
    %1958 = vsyncpa %s1957, 1
    %1959 = vsyncpa [#allocation10], 1
    %s1960 = scalar_lea.sflag [#allocation10], 1
    %1961 = vsyncpa %s1960, 1
    %1962 = vsyncpa [#allocation13], 1
    %s1963 = scalar_lea.sflag [#allocation13], 1
    %1964 = vsyncpa %s1963, 1
    %1965 = vsyncpa [#allocation5], 1
    %s1966 = scalar_lea.sflag [#allocation5], 1
    %1967 = vsyncpa %s1966, 1
    %1968 = vsyncpa [#allocation16], 1
    %s1969 = scalar_lea.sflag [#allocation16], 1
    %1970 = vsyncpa %s1969, 1

</llo_original>
